<compile_context>
chip_gen: v7x
topology: tpu7x:2x2x1
jax: 0.10.0
libtpu: 0.0.40
codegen_flags: <defaults>
</compile_context>

<pallas_src>
import functools

import jax
import jax.numpy as jnp
from jax import lax
from jax.experimental import pallas as pl
from jax.experimental.pallas import tpu as pltpu

SELU_ALPHA = 1.6732632423543772
SELU_SCALE = 1.0507009873554805


def _round_up(x, m):
    return ((x + m - 1) // m) * m


def _vmem_budget_bytes():
    """Generation-aware VMEM budget (v5e/v6e: 128 MiB physical, v7x: 64 MiB)."""
    try:
        cap = int(pltpu.get_tpu_info().vmem_capacity_bytes)
    except Exception:  # pragma: no cover - conservative fallback (v7x size)
        cap = 64 * 1024 * 1024
    limit = min(int(cap * 0.80), cap - (8 << 20))
    plan = int(limit * 0.75)
    return limit, plan


# --------------------------------------------------------------------------- #
# Kernel 1: prologue (assignments, S-only losses, pooled cluster features)    #
# --------------------------------------------------------------------------- #
def _prologue_kernel(feat_ref, w_ref, b_ref,
                     assign_ref, s_aug_ref, nd_ref, spool_ref, fp_ref, loss_ref,
                     *, k, kp, n_total):
    lanes = lax.broadcasted_iota(jnp.int32, (1, kp), 1)
    mask = (lanes < k).astype(jnp.float32)       # real cluster lanes
    ones_col = (lanes == k).astype(jnp.float32)  # fused "degree" column

    feats = feat_ref[...]                                              # [N, Fp] f32
    # padded logits: pad lanes carry -1e30 bias -> exp underflows to exactly 0 in f32
    logits = jnp.dot(feats, w_ref[...],
                     preferred_element_type=jnp.float32) + b_ref[...]  # [N, kp]
    m = jnp.max(logits, axis=1, keepdims=True)
    e = jnp.exp(logits - m)
    s = e * pl.reciprocal(jnp.sum(e, axis=1, keepdims=True), approx=False)
    s = s * mask                                                       # [N, kp]

    assign_ref[...] = s
    s_aug_ref[...] = (s + ones_col).astype(s_aug_ref.dtype)            # bf16 matmul RHS

    # nd rows: lanes < k carry S, lane k carries q = sum_c S^2 (for the denominator)
    q = jnp.sum(s * s, axis=1, keepdims=True)                          # [N, 1]
    nd_ref[...] = s + ones_col * q

    colsum = jnp.sum(s, axis=0, keepdims=True)                         # [1, kp]
    inv_col = mask * pl.reciprocal(colsum + (1.0 - mask), approx=False)
    s_pool = s * inv_col
    spool_ref[...] = s_pool.astype(spool_ref.dtype)                    # bf16 unpool LHS

    # pooled cluster features: selu(S_pool^T X); padded rows/cols are selu(0) = 0
    fp = lax.dot_general(s_pool, feats, (((0,), (0,)), ((), ())),
                         preferred_element_type=jnp.float32)           # [kp, Fp]
    fp = SELU_SCALE * jnp.where(fp > 0, fp, SELU_ALPHA * (jnp.exp(fp) - 1.0))
    fp_ref[...] = fp

    # orthogonality + cluster-size losses (only need S; zero pad lanes drop out)
    pw = lax.dot_general(s, s, (((0,), (0,)), ((), ())),
                         preferred_element_type=jnp.float32)           # [kp, kp]
    r = lax.broadcasted_iota(jnp.int32, (kp, kp), 0)
    c = lax.broadcasted_iota(jnp.int32, (kp, kp), 1)
    eye = jnp.logical_and(r == c, r < k).astype(jnp.float32)
    p_norm = jnp.sqrt(jnp.sum(pw * pw))
    diff = pw / p_norm - eye / jnp.sqrt(jnp.float32(k))
    ortho_loss = jnp.sqrt(jnp.sum(diff * diff))
    row_sums = jnp.sum(pw, axis=1, keepdims=True)
    cluster_loss = (jnp.sqrt(jnp.sum(row_sums * row_sums)) / jnp.float32(n_total)
                    * jnp.sqrt(jnp.float32(k)) - 1.0)

    # lane-dense scalar carrier: lane 0 = ortho, lane 1 = cluster
    loss_ref[...] = (jnp.where(lanes == 0, ortho_loss, 0.0)
                     + jnp.where(lanes == 1, cluster_loss, 0.0))


# --------------------------------------------------------------------------- #
# Kernel 2: streamed adjacency (spectral-loss partials + unpooled features)   #
# --------------------------------------------------------------------------- #
def _stream_kernel(*refs, do_unpool):
    if do_unpool:
        adj_ref, s_aug_ref, nd_ref, spool_ref, fp_ref, part_ref, pooled_ref = refs
    else:
        adj_ref, s_aug_ref, nd_ref, part_ref = refs

    # bf16 x bf16 MXU matmul, f32 accumulation:  [T, N] @ [N, kp]
    gs = jnp.dot(adj_ref[...], s_aug_ref[...], preferred_element_type=jnp.float32)

    # per-lane partials (sublane-only reduce): lanes < k -> numerator terms,
    # lane k -> denominator terms (deg * q).
    part = jnp.sum(gs * nd_ref[...], axis=0, keepdims=True)            # [1, kp]
    part_ref[...] = jnp.broadcast_to(part, part_ref.shape)             # [8, kp]

    if do_unpool:
        pooled_ref[...] = jnp.dot(spool_ref[...], fp_ref[...],
                                  preferred_element_type=jnp.float32)  # [T, Fp]


def _choose_tile_rows(n_cols, kp, fpad, do_unpool, max_rows, budget_bytes):
    """Largest row tile (multiple of 32) whose double-buffered tiles fit the budget."""
    resident = n_cols * kp * 2 + (kp * fpad * 2 if do_unpool else 0)
    for t in (2048, 1024, 512, 256, 128, 64, 32):
        if t > max_rows:
            continue
        per_iter = 2 * t * n_cols * 2          # bf16 adjacency tiles (double-buffered)
        per_iter += 2 * t * kp * 4             # nd rows (f32)
        per_iter += 2 * 8 * kp * 4             # partial output tiles
        if do_unpool:
            per_iter += 2 * t * kp * 2         # s_pool rows (bf16)
            per_iter += 2 * t * fpad * 4       # pooled output rows (f32)
        if resident + per_iter <= budget_bytes:
            return t
    return 32


def mincut_pooling(features, adj, weight, bias, *,
                   orthogonality_regularization=1.0,
                   cluster_size_regularization=1.0,
                   do_unpool=True,
                   adj_compute_dtype=jnp.bfloat16,
                   max_tile_rows=1024):
    """Returns (features_pooled, assignments, losses[spectral, ortho, cluster, renyi]).

    `weight` is stored [F, K] (transposed torch Linear weight); `bias` is [K].
    The adjacency is a dense [N, N] matrix (stand-in for the torch sparse COO graph),
    streamed in bf16 (exact for 0/1 edge weights).
    """
    n, f = features.shape
    f2, k = weight.shape
    assert f2 == f and adj.shape == (n, n)

    kp = _round_up(k + 1, 128)          # cluster lanes (+1 fused degree column)
    fpad = _round_up(max(f, 1), 128)    # lane-dense feature width

    vmem_limit, vmem_plan = _vmem_budget_bytes()

    feats_pad = jnp.zeros((n, fpad), jnp.float32).at[:, :f].set(features.astype(jnp.float32))
    w_pad = jnp.zeros((fpad, kp), jnp.float32).at[:f, :k].set(weight.astype(jnp.float32))
    b_pad = (jnp.full((1, kp), -1e30, jnp.float32)
             .at[:, :k].set(bias.astype(jnp.float32).reshape(1, k)))

    # ------------------ prologue pallas_call (O(N*K + N*F)) ------------------ #
    assign_pad, s_aug, nd, s_pool, fp_f32, loss_vec = pl.pallas_call(
        functools.partial(_prologue_kernel, k=k, kp=kp, n_total=n),
        out_shape=(
            jax.ShapeDtypeStruct((n, kp), jnp.float32),     # assignments (padded lanes)
            jax.ShapeDtypeStruct((n, kp), jnp.bfloat16),    # S + ones column
            jax.ShapeDtypeStruct((n, kp), jnp.float32),     # nd rows (S | q)
            jax.ShapeDtypeStruct((n, kp), jnp.bfloat16),    # s_pool rows
            jax.ShapeDtypeStruct((kp, fpad), jnp.float32),  # selu(S_pool^T X)
            jax.ShapeDtypeStruct((1, kp), jnp.float32),     # [ortho, cluster] in lanes 0/1
        ),
        grid_spec=pltpu.PrefetchScalarGridSpec(
            num_scalar_prefetch=0,
            grid=(1,),
            in_specs=[
                pl.BlockSpec((n, fpad), lambda i: (0, 0)),
                pl.BlockSpec((fpad, kp), lambda i: (0, 0)),
                pl.BlockSpec((1, kp), lambda i: (0, 0)),
            ],
            out_specs=(
                pl.BlockSpec((n, kp), lambda i: (0, 0)),
                pl.BlockSpec((n, kp), lambda i: (0, 0)),
                pl.BlockSpec((n, kp), lambda i: (0, 0)),
                pl.BlockSpec((n, kp), lambda i: (0, 0)),
                pl.BlockSpec((kp, fpad), lambda i: (0, 0)),
                pl.BlockSpec((1, kp), lambda i: (0, 0)),
            ),
        ),
        compiler_params=pltpu.CompilerParams(
            dimension_semantics=("arbitrary",),
            vmem_limit_bytes=vmem_limit,
        ),
    )(feats_pad, w_pad, b_pad)

    # ------------------ streamed adjacency pallas_call (O(N^2)) -------------- #
    tile_n = _choose_tile_rows(n, kp, fpad, do_unpool, max_tile_rows, vmem_plan)
    tile_n = min(tile_n, _round_up(n, 32))
    n_pad = _round_up(n, tile_n)
    nt = n_pad // tile_n
    pad_rows = n_pad - n

    adj_pad = jnp.pad(adj.astype(adj_compute_dtype), ((0, pad_rows), (0, 0)))
    nd_pad = jnp.pad(nd, ((0, pad_rows), (0, 0)))

    stream_inputs = [adj_pad, s_aug, nd_pad]
    in_specs = [
        pl.BlockSpec((tile_n, n), lambda i: (i, 0)),    # adjacency row tiles (streamed)
        pl.BlockSpec((n, kp), lambda i: (0, 0)),        # S + ones (VMEM resident, bf16)
        pl.BlockSpec((tile_n, kp), lambda i: (i, 0)),   # nd rows for this tile
    ]
    part_shape = jax.ShapeDtypeStruct((nt * 8, kp), jnp.float32)
    part_spec = pl.BlockSpec((8, kp), lambda i: (i, 0))

    if do_unpool:
        spool_pad = jnp.pad(s_pool, ((0, pad_rows), (0, 0)))
        fp_bf = fp_f32.astype(jnp.bfloat16)
        stream_inputs += [spool_pad, fp_bf]
        in_specs += [
            pl.BlockSpec((tile_n, kp), lambda i: (i, 0)),
            pl.BlockSpec((kp, fpad), lambda i: (0, 0)),
        ]
        out_shape = (part_shape, jax.ShapeDtypeStruct((n_pad, fpad), jnp.float32))
        out_specs = (part_spec, pl.BlockSpec((tile_n, fpad), lambda i: (i, 0)))
    else:
        out_shape = (part_shape,)
        out_specs = (part_spec,)

    adj_itemsize = jnp.dtype(adj_compute_dtype).itemsize
    cost = pl.CostEstimate(
        flops=int(2 * n_pad * n * kp + (2 * n_pad * kp * fpad if do_unpool else 0)),
        transcendentals=0,
        bytes_accessed=int(n_pad * n * adj_itemsize + n_pad * kp * 4 + n * kp * 2
                           + nt * 8 * kp * 4
                           + ((n_pad * kp * 2 + kp * fpad * 2 + n_pad * fpad * 4)
                              if do_unpool else 0)),
    )

    outs = pl.pallas_call(
        functools.partial(_stream_kernel, do_unpool=do_unpool),
        out_shape=out_shape,
        grid_spec=pltpu.PrefetchScalarGridSpec(
            num_scalar_prefetch=0,
            grid=(nt,),
            in_specs=in_specs,
            out_specs=out_specs,
        ),
        compiler_params=pltpu.CompilerParams(
            dimension_semantics=("parallel",),      # no cross-tile state -> both v7x TCs stream
            vmem_limit_bytes=vmem_limit,
        ),
        cost_estimate=cost,
    )(*stream_inputs)

    # ------------------ wrapper-side reductions / slicing -------------------- #
    part = outs[0][::8]                              # [nt, kp] per-tile lane partials
    num = jnp.sum(part[:, :k])                       # trace(S^T A S)
    den = jnp.sum(part[:, k])                        # trace(S^T diag(deg) S)
    spectral = -(num / den)

    losses = jnp.stack([
        spectral,
        jnp.float32(orthogonality_regularization) * loss_vec[0, 0],
        jnp.float32(cluster_size_regularization) * loss_vec[0, 1],
        jnp.float32(0.0),                            # TODO(synk): renyi_loss undefined in source
    ])

    assignments = assign_pad[:, :k]
    if do_unpool:
        pooled = outs[1][:n, :f]
    else:
        pooled = fp_f32[:k, :f]
    return pooled, assignments, losses


# --------------------------------------------------------------------------- #
# Pure-JAX reference (dense adjacency, high-precision matmuls)                 #
# --------------------------------------------------------------------------- #
def _reference(features, adj, weight, bias, *, do_unpool=True):
    hp = jax.lax.Precision.HIGHEST
    logits = jnp.dot(features, weight, precision=hp) + bias[None, :]
    s = jax.nn.softmax(logits, axis=1)
    s_pool = s / jnp.sum(s, axis=0)
    gs = jnp.dot(adj, s, precision=hp)
    num = jnp.sum(gs * s)
    deg = jnp.sum(adj, axis=-1)
    den = jnp.sum(deg[:, None] * s * s)
    spectral = -(num / den)
    k = s.shape[1]
    pw = jnp.dot(s.T, s, precision=hp)
    ortho = jnp.linalg.norm(pw / jnp.linalg.norm(pw) - jnp.eye(k) / jnp.sqrt(float(k)))
    cluster = jnp.linalg.norm(jnp.sum(pw, axis=1)) / adj.shape[0] * jnp.sqrt(float(k)) - 1.0
    fp = jax.nn.selu(jnp.dot(s_pool.T, features, precision=hp))
    if do_unpool:
        fp = jnp.dot(s_pool, fp, precision=hp)
    return fp, s, jnp.array([spectral, ortho, cluster, 0.0], jnp.float32)


if __name__ == "__main__":
    N, F, K = 256, 32, 8  # nodes, features, clusters (small demo shapes)

    key = jax.random.PRNGKey(0)
    k_feat, k_adj, k_w = jax.random.split(key, 3)

    features = jax.random.normal(k_feat, (N, F), dtype=jnp.float32)

    # synthetic symmetric 0/1 adjacency with self-loops (dense stand-in for sparse graph)
    a = (jax.random.uniform(k_adj, (N, N)) < 0.1).astype(jnp.float32)
    adj = jnp.maximum(a, a.T) + jnp.eye(N, dtype=jnp.float32)

    # orthogonal final-layer weight (torch shape [K, F]) stored transposed as [F, K]; zero bias
    w_torch_layout = jax.nn.initializers.orthogonal()(k_w, (K, F), jnp.float32)
    weight = w_torch_layout.T
    bias = jnp.zeros((K,), jnp.float32)

    pooled, assigns, losses = jax.block_until_ready(
        mincut_pooling(features, adj, weight, bias,
                       orthogonality_regularization=1.0,
                       cluster_size_regularization=1.0,
                       do_unpool=True,
                       max_tile_rows=64))   # force 4 streamed adjacency tiles in the demo

    ref_pooled, ref_assigns, ref_losses = _reference(features, adj, weight, bias, do_unpool=True)
    assert assigns.shape == (N, K) and pooled.shape == (N, F)
    assert jnp.allclose(assigns, ref_assigns, atol=5e-3, rtol=1e-2)
    assert jnp.allclose(pooled, ref_pooled, atol=5e-3, rtol=2e-2)
    assert jnp.allclose(losses[:3], ref_losses[:3], atol=5e-3, rtol=2e-2)

    # also exercise the do_unpool=False path (pooled cluster features [K, F])
    pooled_np, assigns_np, losses_np = jax.block_until_ready(
        mincut_pooling(features, adj, weight, bias, do_unpool=False, max_tile_rows=64))
    ref_pooled_np, _, ref_losses_np = _reference(features, adj, weight, bias, do_unpool=False)
    assert pooled_np.shape == (K, F)
    assert jnp.allclose(pooled_np, ref_pooled_np, atol=5e-3, rtol=2e-2)
    assert jnp.allclose(losses_np[:3], ref_losses_np[:3], atol=5e-3, rtol=2e-2)

    print("KERNEL_OK")
</pallas_src>

<mosaic_0001>
module attributes {stable_mosaic.version = 11 : i64} {
  func.func @_prologue_kernel(%arg0: i32, %arg1: memref<256x128xf32, #tpu.memory_space<vmem>>, %arg2: memref<128x128xf32, #tpu.memory_space<vmem>>, %arg3: memref<1x128xf32, #tpu.memory_space<vmem>>, %arg4: memref<256x128xf32, #tpu.memory_space<vmem>>, %arg5: memref<256x128xbf16, #tpu.memory_space<vmem>>, %arg6: memref<256x128xf32, #tpu.memory_space<vmem>>, %arg7: memref<256x128xbf16, #tpu.memory_space<vmem>>, %arg8: memref<128x128xf32, #tpu.memory_space<vmem>>, %arg9: memref<1x128xf32, #tpu.memory_space<vmem>>) attributes {dimension_semantics = [#tpu.dimension_semantics<arbitrary>], iteration_bounds = array<i64: 1>, scalar_prefetch = 0 : i64, scratch_operands = 0 : i64, tpu.core_type = #tpu.core_type<tc>, window_params = [{pipeline_mode = #tpu.pipeline_mode<synchronous>, transform_indices = @transform_0, window_bounds = array<i64: 256, 128>}, {pipeline_mode = #tpu.pipeline_mode<synchronous>, transform_indices = @transform_1, window_bounds = array<i64: 128, 128>}, {pipeline_mode = #tpu.pipeline_mode<synchronous>, transform_indices = @transform_2, window_bounds = array<i64: 1, 128>}, {pipeline_mode = #tpu.pipeline_mode<synchronous>, transform_indices = @transform_3, window_bounds = array<i64: 256, 128>}, {pipeline_mode = #tpu.pipeline_mode<synchronous>, transform_indices = @transform_4, window_bounds = array<i64: 256, 128>}, {pipeline_mode = #tpu.pipeline_mode<synchronous>, transform_indices = @transform_5, window_bounds = array<i64: 256, 128>}, {pipeline_mode = #tpu.pipeline_mode<synchronous>, transform_indices = @transform_6, window_bounds = array<i64: 256, 128>}, {pipeline_mode = #tpu.pipeline_mode<synchronous>, transform_indices = @transform_7, window_bounds = array<i64: 128, 128>}, {pipeline_mode = #tpu.pipeline_mode<synchronous>, transform_indices = @transform_8, window_bounds = array<i64: 1, 128>}]} {
    %0 = tpu.iota {dimensions = array<i32: 1>} : vector<1x128xi32>
    %c8_i32 = arith.constant 8 : i32
    %1 = vector.broadcast %c8_i32 : i32 to vector<1x128xi32>
    %2 = arith.cmpi slt, %0, %1 : vector<1x128xi32>
    %3 = arith.extui %2 : vector<1x128xi1> to vector<1x128xi32>
    %4 = arith.sitofp %3 : vector<1x128xi32> to vector<1x128xf32>
    %c8_i32_0 = arith.constant 8 : i32
    %5 = vector.broadcast %c8_i32_0 : i32 to vector<1x128xi32>
    %6 = arith.cmpi eq, %0, %5 : vector<1x128xi32>
    %7 = arith.extui %6 : vector<1x128xi1> to vector<1x128xi32>
    %8 = arith.sitofp %7 : vector<1x128xi32> to vector<1x128xf32>
    %c0 = arith.constant 0 : index
    %c0_1 = arith.constant 0 : index
    %9 = vector.load %arg1[%c0, %c0_1] : memref<256x128xf32, #tpu.memory_space<vmem>>, vector<256x128xf32>
    %c0_2 = arith.constant 0 : index
    %c0_3 = arith.constant 0 : index
    %10 = vector.load %arg2[%c0_2, %c0_3] : memref<128x128xf32, #tpu.memory_space<vmem>>, vector<128x128xf32>
    %cst = arith.constant dense<0.000000e+00> : vector<256x128xf32>
    %11 = tpu.matmul %9, %10, %cst {dimension_numbers = #tpu.dot_dimension_numbers<[1], [0], [0], [1], [0, 0, 1, 1], [], []>} : vector<256x128xf32>, vector<128x128xf32>, vector<256x128xf32> -> vector<256x128xf32>
    %c0_4 = arith.constant 0 : index
    %c0_5 = arith.constant 0 : index
    %12 = vector.load %arg3[%c0_4, %c0_5] : memref<1x128xf32, #tpu.memory_space<vmem>>, vector<1x128xf32>
    %13 = vector.broadcast %12 : vector<1x128xf32> to vector<256x128xf32>
    %14 = arith.addf %11, %13 : vector<256x128xf32>
    %cst_6 = arith.constant dense<0xFF800000> : vector<256xf32>
    %15 = vector.multi_reduction <maximumf>, %14, %cst_6 [1] : vector<256x128xf32> to vector<256xf32>
    %16 = vector.shape_cast %15 : vector<256xf32> to vector<256x1xf32>
    %17 = vector.broadcast %16 : vector<256x1xf32> to vector<256x128xf32>
    %18 = arith.subf %14, %17 : vector<256x128xf32>
    %19 = math.exp %18 : vector<256x128xf32>
    %cst_7 = arith.constant dense<0.000000e+00> : vector<256xf32>
    %20 = vector.multi_reduction <add>, %19, %cst_7 [1] : vector<256x128xf32> to vector<256xf32>
    %21 = vector.shape_cast %20 : vector<256xf32> to vector<256x1xf32>
    %22 = tpu.reciprocal %21 : vector<256x1xf32> -> vector<256x1xf32>
    %23 = vector.broadcast %22 : vector<256x1xf32> to vector<256x128xf32>
    %24 = arith.mulf %19, %23 : vector<256x128xf32>
    %25 = vector.broadcast %4 : vector<1x128xf32> to vector<256x128xf32>
    %26 = arith.mulf %24, %25 : vector<256x128xf32>
    %c0_8 = arith.constant 0 : index
    %c0_9 = arith.constant 0 : index
    %27 = vector.load %arg4[%c0_8, %c0_9] : memref<256x128xf32, #tpu.memory_space<vmem>>, vector<256x128xf32>
    tpu.vector_store %arg4[%c0_8, %c0_9], %26 {strides = array<i32>} : memref<256x128xf32, #tpu.memory_space<vmem>>, vector<256x128xf32>,
    %28 = vector.broadcast %8 : vector<1x128xf32> to vector<256x128xf32>
    %29 = arith.addf %26, %28 : vector<256x128xf32>
    %30 = arith.truncf %29 : vector<256x128xf32> to vector<256x128xbf16>
    %c0_10 = arith.constant 0 : index
    %c0_11 = arith.constant 0 : index
    %31 = vector.load %arg5[%c0_10, %c0_11] : memref<256x128xbf16, #tpu.memory_space<vmem>>, vector<256x128xbf16>
    tpu.vector_store %arg5[%c0_10, %c0_11], %30 {strides = array<i32>} : memref<256x128xbf16, #tpu.memory_space<vmem>>, vector<256x128xbf16>,
    %32 = arith.mulf %26, %26 : vector<256x128xf32>
    %cst_12 = arith.constant dense<0.000000e+00> : vector<256xf32>
    %33 = vector.multi_reduction <add>, %32, %cst_12 [1] : vector<256x128xf32> to vector<256xf32>
    %34 = vector.shape_cast %33 : vector<256xf32> to vector<256x1xf32>
    %35 = vector.broadcast %8 : vector<1x128xf32> to vector<256x128xf32>
    %36 = vector.broadcast %34 : vector<256x1xf32> to vector<256x128xf32>
    %37 = arith.mulf %35, %36 : vector<256x128xf32>
    %38 = arith.addf %26, %37 : vector<256x128xf32>
    %c0_13 = arith.constant 0 : index
    %c0_14 = arith.constant 0 : index
    %39 = vector.load %arg6[%c0_13, %c0_14] : memref<256x128xf32, #tpu.memory_space<vmem>>, vector<256x128xf32>
    tpu.vector_store %arg6[%c0_13, %c0_14], %38 {strides = array<i32>} : memref<256x128xf32, #tpu.memory_space<vmem>>, vector<256x128xf32>,
    %cst_15 = arith.constant dense<0.000000e+00> : vector<128xf32>
    %40 = vector.multi_reduction <add>, %26, %cst_15 [0] : vector<256x128xf32> to vector<128xf32>
    %41 = vector.shape_cast %40 : vector<128xf32> to vector<1x128xf32>
    %cst_16 = arith.constant 1.000000e+00 : f32
    %42 = vector.broadcast %cst_16 : f32 to vector<1x128xf32>
    %43 = arith.subf %42, %4 : vector<1x128xf32>
    %44 = arith.addf %41, %43 : vector<1x128xf32>
    %45 = tpu.reciprocal %44 : vector<1x128xf32> -> vector<1x128xf32>
    %46 = arith.mulf %4, %45 : vector<1x128xf32>
    %47 = vector.broadcast %46 : vector<1x128xf32> to vector<256x128xf32>
    %48 = arith.mulf %26, %47 : vector<256x128xf32>
    %49 = arith.truncf %48 : vector<256x128xf32> to vector<256x128xbf16>
    %c0_17 = arith.constant 0 : index
    %c0_18 = arith.constant 0 : index
    %50 = vector.load %arg7[%c0_17, %c0_18] : memref<256x128xbf16, #tpu.memory_space<vmem>>, vector<256x128xbf16>
    tpu.vector_store %arg7[%c0_17, %c0_18], %49 {strides = array<i32>} : memref<256x128xbf16, #tpu.memory_space<vmem>>, vector<256x128xbf16>,
    %cst_19 = arith.constant dense<0.000000e+00> : vector<128x128xf32>
    %51 = tpu.matmul %48, %9, %cst_19 {dimension_numbers = #tpu.dot_dimension_numbers<[0], [0], [1], [1], [0, 1, 1, 1], [], []>} : vector<256x128xf32>, vector<256x128xf32>, vector<128x128xf32> -> vector<128x128xf32>
    %cst_20 = arith.constant 0.000000e+00 : f32
    %52 = vector.broadcast %cst_20 : f32 to vector<128x128xf32>
    %53 = arith.cmpf ogt, %51, %52 : vector<128x128xf32>
    %54 = math.exp %51 : vector<128x128xf32>
    %cst_21 = arith.constant 1.000000e+00 : f32
    %55 = vector.broadcast %cst_21 : f32 to vector<128x128xf32>
    %56 = arith.subf %54, %55 : vector<128x128xf32>
    %cst_22 = arith.constant 1.67326319 : f32
    %57 = vector.broadcast %cst_22 : f32 to vector<128x128xf32>
    %58 = arith.mulf %57, %56 : vector<128x128xf32>
    %59 = arith.select %53, %51, %58 : vector<128x128xi1>, vector<128x128xf32>
    %cst_23 = arith.constant 1.05070102 : f32
    %60 = vector.broadcast %cst_23 : f32 to vector<128x128xf32>
    %61 = arith.mulf %60, %59 : vector<128x128xf32>
    %c0_24 = arith.constant 0 : index
    %c0_25 = arith.constant 0 : index
    %62 = vector.load %arg8[%c0_24, %c0_25] : memref<128x128xf32, #tpu.memory_space<vmem>>, vector<128x128xf32>
    tpu.vector_store %arg8[%c0_24, %c0_25], %61 {strides = array<i32>} : memref<128x128xf32, #tpu.memory_space<vmem>>, vector<128x128xf32>,
    %cst_26 = arith.constant dense<0.000000e+00> : vector<128x128xf32>
    %63 = tpu.matmul %26, %26, %cst_26 {dimension_numbers = #tpu.dot_dimension_numbers<[0], [0], [1], [1], [0, 1, 1, 1], [], []>} : vector<256x128xf32>, vector<256x128xf32>, vector<128x128xf32> -> vector<128x128xf32>
    %64 = tpu.iota {dimensions = array<i32: 0>} : vector<128x128xi32>
    %65 = tpu.iota {dimensions = array<i32: 1>} : vector<128x128xi32>
    %66 = arith.cmpi eq, %64, %65 : vector<128x128xi32>
    %c8_i32_27 = arith.constant 8 : i32
    %67 = vector.broadcast %c8_i32_27 : i32 to vector<128x128xi32>
    %68 = arith.cmpi slt, %64, %67 : vector<128x128xi32>
    %69 = arith.andi %66, %68 : vector<128x128xi1>
    %70 = arith.extui %69 : vector<128x128xi1> to vector<128x128xi32>
    %71 = arith.sitofp %70 : vector<128x128xi32> to vector<128x128xf32>
    %72 = arith.mulf %63, %63 : vector<128x128xf32>
    %73 = vector.shape_cast %72 : vector<128x128xf32> to vector<1x128x128xf32>
    %cst_28 = arith.constant dense<0.000000e+00> : vector<1xf32>
    %74 = vector.multi_reduction <add>, %73, %cst_28 [1, 2] : vector<1x128x128xf32> to vector<1xf32>
    %75 = vector.shape_cast %74 : vector<1xf32> to vector<1x1x1xf32>
    %76 = vector.extract %75[0, 0, 0] : f32 from vector<1x1x1xf32>
    %77 = math.sqrt %76 : f32
    %78 = vector.broadcast %77 : f32 to vector<128x128xf32>
    %79 = arith.divf %63, %78 : vector<128x128xf32>
    %cst_29 = arith.constant 8.000000e+00 : f32
    %80 = math.sqrt %cst_29 : f32
    %81 = vector.broadcast %80 : f32 to vector<128x128xf32>
    %82 = arith.divf %71, %81 : vector<128x128xf32>
    %83 = arith.subf %79, %82 : vector<128x128xf32>
    %84 = arith.mulf %83, %83 : vector<128x128xf32>
    %85 = vector.shape_cast %84 : vector<128x128xf32> to vector<1x128x128xf32>
    %cst_30 = arith.constant dense<0.000000e+00> : vector<1xf32>
    %86 = vector.multi_reduction <add>, %85, %cst_30 [1, 2] : vector<1x128x128xf32> to vector<1xf32>
    %87 = vector.shape_cast %86 : vector<1xf32> to vector<1x1x1xf32>
    %88 = vector.extract %87[0, 0, 0] : f32 from vector<1x1x1xf32>
    %89 = math.sqrt %88 : f32
    %cst_31 = arith.constant dense<0.000000e+00> : vector<128xf32>
    %90 = vector.multi_reduction <add>, %63, %cst_31 [1] : vector<128x128xf32> to vector<128xf32>
    %91 = vector.shape_cast %90 : vector<128xf32> to vector<128x1xf32>
    %92 = arith.mulf %91, %91 : vector<128x1xf32>
    %93 = vector.shape_cast %92 : vector<128x1xf32> to vector<1x128x1xf32>
    %cst_32 = arith.constant dense<0.000000e+00> : vector<1xf32>
    %94 = vector.multi_reduction <add>, %93, %cst_32 [1, 2] : vector<1x128x1xf32> to vector<1xf32>
    %95 = vector.shape_cast %94 : vector<1xf32> to vector<1x1x1xf32>
    %96 = vector.extract %95[0, 0, 0] : f32 from vector<1x1x1xf32>
    %97 = math.sqrt %96 : f32
    %cst_33 = arith.constant 2.560000e+02 : f32
    %98 = arith.divf %97, %cst_33 : f32
    %cst_34 = arith.constant 8.000000e+00 : f32
    %99 = math.sqrt %cst_34 : f32
    %100 = arith.mulf %98, %99 : f32
    %cst_35 = arith.constant 1.000000e+00 : f32
    %101 = arith.subf %100, %cst_35 : f32
    %c0_i32 = arith.constant 0 : i32
    %102 = vector.broadcast %c0_i32 : i32 to vector<1x128xi32>
    %103 = arith.cmpi eq, %0, %102 : vector<1x128xi32>
    %cst_36 = arith.constant 0.000000e+00 : f32
    %104 = vector.broadcast %89 : f32 to vector<1x128xf32>
    %105 = vector.broadcast %cst_36 : f32 to vector<1x128xf32>
    %106 = arith.select %103, %104, %105 : vector<1x128xi1>, vector<1x128xf32>
    %c1_i32 = arith.constant 1 : i32
    %107 = vector.broadcast %c1_i32 : i32 to vector<1x128xi32>
    %108 = arith.cmpi eq, %0, %107 : vector<1x128xi32>
    %cst_37 = arith.constant 0.000000e+00 : f32
    %109 = vector.broadcast %101 : f32 to vector<1x128xf32>
    %110 = vector.broadcast %cst_37 : f32 to vector<1x128xf32>
    %111 = arith.select %108, %109, %110 : vector<1x128xi1>, vector<1x128xf32>
    %112 = arith.addf %106, %111 : vector<1x128xf32>
    %c0_38 = arith.constant 0 : index
    %c0_39 = arith.constant 0 : index
    %113 = vector.load %arg9[%c0_38, %c0_39] : memref<1x128xf32, #tpu.memory_space<vmem>>, vector<1x128xf32>
    tpu.vector_store %arg9[%c0_38, %c0_39], %112 {strides = array<i32>} : memref<1x128xf32, #tpu.memory_space<vmem>>, vector<1x128xf32>,
    return
  }
  func.func @transform_0(%arg0: i32) -> (i32, i32) {
    %c0_i32 = arith.constant 0 : i32
    %c0_i32_0 = arith.constant 0 : i32
    %c0_i32_1 = arith.constant 0 : i32
    return %c0_i32, %c0_i32_0 : i32, i32
  }
  func.func @transform_1(%arg0: i32) -> (i32, i32) {
    %c0_i32 = arith.constant 0 : i32
    %c0_i32_0 = arith.constant 0 : i32
    %c0_i32_1 = arith.constant 0 : i32
    return %c0_i32, %c0_i32_0 : i32, i32
  }
  func.func @transform_2(%arg0: i32) -> (i32, i32) {
    %c0_i32 = arith.constant 0 : i32
    %c0_i32_0 = arith.constant 0 : i32
    %c0_i32_1 = arith.constant 0 : i32
    return %c0_i32, %c0_i32_0 : i32, i32
  }
  func.func @transform_3(%arg0: i32) -> (i32, i32) {
    %c0_i32 = arith.constant 0 : i32
    %c0_i32_0 = arith.constant 0 : i32
    %c0_i32_1 = arith.constant 0 : i32
    return %c0_i32, %c0_i32_0 : i32, i32
  }
  func.func @transform_4(%arg0: i32) -> (i32, i32) {
    %c0_i32 = arith.constant 0 : i32
    %c0_i32_0 = arith.constant 0 : i32
    %c0_i32_1 = arith.constant 0 : i32
    return %c0_i32, %c0_i32_0 : i32, i32
  }
  func.func @transform_5(%arg0: i32) -> (i32, i32) {
    %c0_i32 = arith.constant 0 : i32
    %c0_i32_0 = arith.constant 0 : i32
    %c0_i32_1 = arith.constant 0 : i32
    return %c0_i32, %c0_i32_0 : i32, i32
  }
  func.func @transform_6(%arg0: i32) -> (i32, i32) {
    %c0_i32 = arith.constant 0 : i32
    %c0_i32_0 = arith.constant 0 : i32
    %c0_i32_1 = arith.constant 0 : i32
    return %c0_i32, %c0_i32_0 : i32, i32
  }
  func.func @transform_7(%arg0: i32) -> (i32, i32) {
    %c0_i32 = arith.constant 0 : i32
    %c0_i32_0 = arith.constant 0 : i32
    %c0_i32_1 = arith.constant 0 : i32
    return %c0_i32, %c0_i32_0 : i32, i32
  }
  func.func @transform_8(%arg0: i32) -> (i32, i32) {
    %c0_i32 = arith.constant 0 : i32
    %c0_i32_0 = arith.constant 0 : i32
    %c0_i32_1 = arith.constant 0 : i32
    return %c0_i32, %c0_i32_0 : i32, i32
  }
}

</mosaic_0001>

<llo_original>
// kernel: tpu_custom_call.1
$region0: #{tpu_custom_call.1}
  #allocation0 [shape = 'u32[]', space=smem, size = 0x4, offset = 0x4, fixed_abs, tag = 'smem constant byte address 0x4 - core index']
  #allocation1 [shape = 'u32[144,128]{1,0:T(1,128)}', space=vmem, size = 0x12000, scoped, tag = 'internal scratch']
  %s0 = inlined_call_operand.hbm [shape: f32[256,128], index: 0, kind: input, shape index: {}]
  %s1 = inlined_call_operand.hbm [shape: f32[128,128], index: 1, kind: input, shape index: {}]
  %s2 = inlined_call_operand.vmem [shape: f32[1,128], index: 2, kind: input, shape index: {}]
  %s3 = inlined_call_operand.hbm [shape: f32[256,128], index: 3, kind: output, shape index: {0}]
  %s4 = inlined_call_operand.hbm [shape: bf16[256,128], index: 4, kind: output, shape index: {1}]
  %s5 = inlined_call_operand.hbm [shape: f32[256,128], index: 5, kind: output, shape index: {2}]
  %s6 = inlined_call_operand.hbm [shape: bf16[256,128], index: 6, kind: output, shape index: {3}]
  %s7 = inlined_call_operand.hbm [shape: f32[128,128], index: 7, kind: output, shape index: {4}]
  %s8 = inlined_call_operand.hbm [shape: f32[1,128], index: 8, kind: output, shape index: {5}]
  %9 = xla_tuple %s3, %s4, %s5, %s6, %s7, %s8
  %s10 = sld [smem:[#allocation0]]
  $region70: #{tpu_custom_call.1} parent=0
    _
  %s12 = ssub.s32 1, %s10
  %s13 = scalar_select 0, %s12, %s10
  $region1: #{tpu_custom_call.1} parent=0
    #allocation2 [shape = 'u8[131072]{0}', space=vmem, size = 0x20000, scoped, tag = 'input window, operand 0, single buffered']
    #allocation3 [shape = 's32[1]{0}', space=sflag, size = 0x4, scoped, tag = 'scoped memory for tpu_custom_call.1']
    #allocation4 [shape = 's32[1]{0}', space=sflag, size = 0x4, scoped, tag = 'scoped memory for tpu_custom_call.1']
    #allocation5 [shape = 'u8[65536]{0}', space=vmem, size = 0x10000, scoped, tag = 'input window, operand 1, single buffered']
    #allocation6 [shape = 's32[1]{0}', space=sflag, size = 0x4, scoped, tag = 'scoped memory for tpu_custom_call.1']
    #allocation7 [shape = 'u8[131072]{0}', space=vmem, size = 0x20000, scoped, tag = 'output window, operand 0, single buffered']
    #allocation8 [shape = 'u8[65536]{0}', space=vmem, size = 0x10000, scoped, tag = 'output window, operand 1, single buffered']
    #allocation9 [shape = 's32[1]{0}', space=sflag, size = 0x4, scoped, tag = 'scoped memory for tpu_custom_call.1']
    #allocation10 [shape = 'u8[131072]{0}', space=vmem, size = 0x20000, scoped, tag = 'output window, operand 2, single buffered']
    #allocation11 [shape = 'u8[65536]{0}', space=vmem, size = 0x10000, scoped, tag = 'output window, operand 3, single buffered']
    #allocation12 [shape = 's32[1]{0}', space=sflag, size = 0x4, scoped, tag = 'scoped memory for tpu_custom_call.1']
    #allocation13 [shape = 'u8[65536]{0}', space=vmem, size = 0x10000, scoped, tag = 'output window, operand 4, single buffered']
    #allocation14 [shape = 'u8[512]{0}', space=vmem, size = 0x400, scoped, tag = 'output window, operand 5, single buffered']
    #allocation15 [shape = 's32[1]{0}', space=sflag, size = 0x4, scoped, tag = 'scoped memory for tpu_custom_call.1']
    %14 = vsyncpa [#allocation3], 0
    %15 = vsyncpa [#allocation6], 0
    %16 = vsyncpa [#allocation4], 0
    %17 = vsyncpa [#allocation9], 0
    %18 = vsyncpa [#allocation12], 0
    %19 = vsyncpa [#allocation15], 0
    // Predicated region
    $region2: #{tpu_custom_call.1} parent=1 // pred_check
      _
    $region3: #{tpu_custom_call.1} parent=1 // pred_check_branch
      %21 = sbr.rel (0) target = $region5
    $region4: #{tpu_custom_call.1} parent=1 // pred_region
      %s23 = ssub.s32 4096, 4096
      %24 = vsyncadd [#allocation3], %s23
      %s25 = sshll.u32 [#allocation2], 4
      %s26 = int_to_ptr.vmem [resolvable:$true] %s25
      %31 = dma.hbm_to_vmem [thread:$0]  %s0, 4096, %s26, [#allocation3], 128, 128, 8
    $region5: #{tpu_custom_call.1} parent=1 // pred_fallthru
      _
    // Predicated region
    $region6: #{tpu_custom_call.1} parent=1 // pred_check
      _
    $region7: #{tpu_custom_call.1} parent=1 // pred_check_branch
      %33 = sbr.rel (0) target = $region9
    $region8: #{tpu_custom_call.1} parent=1 // pred_region
      %s35 = ssub.s32 2048, 2048
      %36 = vsyncadd [#allocation6], %s35
      %s37 = sshll.u32 [#allocation5], 4
      %s38 = int_to_ptr.vmem [resolvable:$true] %s37
      %43 = dma.hbm_to_vmem [thread:$0]  %s1, 2048, %s38, [#allocation6], 128, 128, 8
    $region9: #{tpu_custom_call.1} parent=1 // pred_fallthru
      _
    // Predicated region
    $region10: #{tpu_custom_call.1} parent=1 // pred_check
      _
    $region11: #{tpu_custom_call.1} parent=1 // pred_check_branch
      %45 = sbr.rel (0) target = $region13
    $region12: #{tpu_custom_call.1} parent=1 // pred_region
      _
    $region13: #{tpu_custom_call.1} parent=1 // pred_fallthru
      _
    // Predicated region
    $region14: #{tpu_custom_call.1} parent=1 // pred_check
      _
    $region15: #{tpu_custom_call.1} parent=1 // pred_check_branch
      %47 = sbr.rel (0) target = $region17
    $region16: #{tpu_custom_call.1} parent=1 // pred_region
      %48 = dma.done [#allocation3], 4096
    $region17: #{tpu_custom_call.1} parent=1 // pred_fallthru
      _
    // Predicated region
    $region18: #{tpu_custom_call.1} parent=1 // pred_check
      _
    $region19: #{tpu_custom_call.1} parent=1 // pred_check_branch
      %50 = sbr.rel (0) target = $region21
    $region20: #{tpu_custom_call.1} parent=1 // pred_region
      %51 = dma.done [#allocation6], 2048
    $region21: #{tpu_custom_call.1} parent=1 // pred_fallthru
      _
    %v52 = vlaneseq
    %v53 = vand.u32 %v52, 127
    %vm54 = vcmp.lt.s32.totalorder %v53, 8
    %v55 = vsel %vm54, 1, 0
    %v56 = vcvt.s32.f32 %v55
    %vm57 = vcmp.eq.s32.totalorder %v53, 8
    %v58 = vsel %vm57, 1, 0
    %v59 = vcvt.s32.f32 %v58
    %v60 = vld [vmem:[#allocation2] sm:$0xff]
    %v61 = vld [vmem:[#allocation2 + $0x8] sm:$0xff]
    %v62 = vld [vmem:[#allocation2 + $0x10] sm:$0xff]
    %v63 = vld [vmem:[#allocation2 + $0x18] sm:$0xff]
    %v64 = vld [vmem:[#allocation2 + $0x20] sm:$0xff]
    %v65 = vld [vmem:[#allocation2 + $0x28] sm:$0xff]
    %v66 = vld [vmem:[#allocation2 + $0x30] sm:$0xff]
    %v67 = vld [vmem:[#allocation2 + $0x38] sm:$0xff]
    %v68 = vld [vmem:[#allocation2 + $0x40] sm:$0xff]
    %v69 = vld [vmem:[#allocation2 + $0x48] sm:$0xff]
    %v70 = vld [vmem:[#allocation2 + $0x50] sm:$0xff]
    %v71 = vld [vmem:[#allocation2 + $0x58] sm:$0xff]
    %v72 = vld [vmem:[#allocation2 + $0x60] sm:$0xff]
    %v73 = vld [vmem:[#allocation2 + $0x68] sm:$0xff]
    %v74 = vld [vmem:[#allocation2 + $0x70] sm:$0xff]
    %v75 = vld [vmem:[#allocation2 + $0x78] sm:$0xff]
    %v76 = vld [vmem:[#allocation2 + $0x80] sm:$0xff]
    %v77 = vld [vmem:[#allocation2 + $0x88] sm:$0xff]
    %v78 = vld [vmem:[#allocation2 + $0x90] sm:$0xff]
    %v79 = vld [vmem:[#allocation2 + $0x98] sm:$0xff]
    %v80 = vld [vmem:[#allocation2 + $0xa0] sm:$0xff]
    %v81 = vld [vmem:[#allocation2 + $0xa8] sm:$0xff]
    %v82 = vld [vmem:[#allocation2 + $0xb0] sm:$0xff]
    %v83 = vld [vmem:[#allocation2 + $0xb8] sm:$0xff]
    %v84 = vld [vmem:[#allocation2 + $0xc0] sm:$0xff]
    %v85 = vld [vmem:[#allocation2 + $0xc8] sm:$0xff]
    %v86 = vld [vmem:[#allocation2 + $0xd0] sm:$0xff]
    %v87 = vld [vmem:[#allocation2 + $0xd8] sm:$0xff]
    %v88 = vld [vmem:[#allocation2 + $0xe0] sm:$0xff]
    %v89 = vld [vmem:[#allocation2 + $0xe8] sm:$0xff]
    %v90 = vld [vmem:[#allocation2 + $0xf0] sm:$0xff]
    %v91 = vld [vmem:[#allocation2 + $0xf8] sm:$0xff]
    %v92 = vld [vmem:[#allocation5] sm:$0xff]
    %v93 = vld [vmem:[#allocation5 + $0x8] sm:$0xff]
    %v94 = vld [vmem:[#allocation5 + $0x10] sm:$0xff]
    %v95 = vld [vmem:[#allocation5 + $0x18] sm:$0xff]
    %v96 = vld [vmem:[#allocation5 + $0x20] sm:$0xff]
    %v97 = vld [vmem:[#allocation5 + $0x28] sm:$0xff]
    %v98 = vld [vmem:[#allocation5 + $0x30] sm:$0xff]
    %v99 = vld [vmem:[#allocation5 + $0x38] sm:$0xff]
    %v100 = vld [vmem:[#allocation5 + $0x40] sm:$0xff]
    %v101 = vld [vmem:[#allocation5 + $0x48] sm:$0xff]
    %v102 = vld [vmem:[#allocation5 + $0x50] sm:$0xff]
    %v103 = vld [vmem:[#allocation5 + $0x58] sm:$0xff]
    %v104 = vld [vmem:[#allocation5 + $0x60] sm:$0xff]
    %v105 = vld [vmem:[#allocation5 + $0x68] sm:$0xff]
    %v106 = vld [vmem:[#allocation5 + $0x70] sm:$0xff]
    %v107 = vld [vmem:[#allocation5 + $0x78] sm:$0xff]
    %v108 = vld [vmem:[%s2] sm:$0x1]
    %v110 = vlaneseq
    %v111 = vshrl.u32 %v110, 7
    %v112 = vsub.s32 0, %v111
    %v113 = vrot.slane %v108, %v112
    %115 = vmatprep.subr.mxu0 0.0
    %116 = vmatpush1.msra.mxu0 %v92
    %117 = vmatprep.subr.mxu0 0.0
    %118 = vmatpush1.msra.mxu0 %v93
    %119 = vmatprep.subr.mxu0 0.0
    %120 = vmatpush1.msra.mxu0 %v94
    %121 = vmatprep.subr.mxu0 0.0
    %122 = vmatpush1.msra.mxu0 %v95
    %123 = vmatprep.subr.mxu0 0.0
    %124 = vmatpush1.msra.mxu0 %v96
    %125 = vmatprep.subr.mxu0 0.0
    %126 = vmatpush1.msra.mxu0 %v97
    %127 = vmatprep.subr.mxu0 0.0
    %128 = vmatpush1.msra.mxu0 %v98
    %129 = vmatprep.subr.mxu0 0.0
    %130 = vmatpush1.msra.mxu0 %v99
    %131 = vmatprep.subr.mxu0 0.0
    %132 = vmatpush1.msra.mxu0 %v100
    %133 = vmatprep.subr.mxu0 0.0
    %134 = vmatpush1.msra.mxu0 %v101
    %135 = vmatprep.subr.mxu0 0.0
    %136 = vmatpush1.msra.mxu0 %v102
    %137 = vmatprep.subr.mxu0 0.0
    %138 = vmatpush1.msra.mxu0 %v103
    %139 = vmatprep.subr.mxu0 0.0
    %140 = vmatpush1.msra.mxu0 %v104
    %141 = vmatprep.subr.mxu0 0.0
    %142 = vmatpush1.msra.mxu0 %v105
    %143 = vmatprep.subr.mxu0 0.0
    %144 = vmatpush1.msra.mxu0 %v106
    %145 = vmatprep.subr.mxu0 0.0
    %146 = vmatpush1.msra.mxu0 %v107
    %147 = vmatprep.subr.mxu0 0.0
    %148 = vmatpush1.msra.mxu0 0.0
    %149 = vmatprep.subr.mxu0 0.0
    %150 = vmatpush1.msra.mxu0 0.0
    %151 = vmatprep.subr.mxu0 0.0
    %152 = vmatpush1.msra.mxu0 0.0
    %153 = vmatprep.subr.mxu0 0.0
    %154 = vmatpush1.msra.mxu0 0.0
    %155 = vmatprep.subr.mxu0 0.0
    %156 = vmatpush1.msra.mxu0 0.0
    %157 = vmatprep.subr.mxu0 0.0
    %158 = vmatpush1.msra.mxu0 0.0
    %159 = vmatprep.subr.mxu0 0.0
    %160 = vmatpush1.msra.mxu0 0.0
    %161 = vmatprep.subr.mxu0 0.0
    %162 = vmatpush1.msra.mxu0 0.0
    %163 = vmatprep.subr.mxu0 0.0
    %164 = vmatpush1.msra.mxu0 0.0
    %165 = vmatprep.subr.mxu0 0.0
    %166 = vmatpush1.msra.mxu0 0.0
    %167 = vmatprep.subr.mxu0 0.0
    %168 = vmatpush1.msra.mxu0 0.0
    %169 = vmatprep.subr.mxu0 0.0
    %170 = vmatpush1.msra.mxu0 0.0
    %171 = vmatprep.subr.mxu0 0.0
    %172 = vmatpush1.msra.mxu0 0.0
    %173 = vmatprep.subr.mxu0 0.0
    %174 = vmatpush1.msra.mxu0 0.0
    %175 = vmatprep.subr.mxu0 0.0
    %176 = vmatpush1.msra.mxu0 0.0
    %177 = vmatprep.subr.mxu0 0.0
    %178 = vmatpush1.msra.mxu0 0.0
    %179 = vmatprep.mubr.f32.mxu0 0.0
    %180 = vmatmul.mubr.f32.gmra.mrb[0].mxu0 %v60
    %v181 = vpop.f32.mrb[0].mxu0
    %v182 = vadd.f32 %v113, %v181
    %v183 = vpop.f32.mrb[0].mxu0
    %184 = vmatprep.mubr.f32.mxu0 0.0
    %185 = vmatmul.mubr.f32.gmra.mrb[0].mxu0 %v61
    %v186 = vpop.f32.mrb[0].mxu0
    %v187 = vadd.f32 %v113, %v186
    %v188 = vpop.f32.mrb[0].mxu0
    %189 = vmatprep.mubr.f32.mxu0 0.0
    %190 = vmatmul.mubr.f32.gmra.mrb[0].mxu0 %v62
    %v191 = vpop.f32.mrb[0].mxu0
    %v192 = vadd.f32 %v113, %v191
    %v193 = vpop.f32.mrb[0].mxu0
    %194 = vmatprep.mubr.f32.mxu0 0.0
    %195 = vmatmul.mubr.f32.gmra.mrb[0].mxu0 %v63
    %v196 = vpop.f32.mrb[0].mxu0
    %v197 = vadd.f32 %v113, %v196
    %v198 = vpop.f32.mrb[0].mxu0
    %199 = vmatprep.mubr.f32.mxu0 0.0
    %200 = vmatmul.mubr.f32.gmra.mrb[0].mxu0 %v64
    %v201 = vpop.f32.mrb[0].mxu0
    %v202 = vadd.f32 %v113, %v201
    %v203 = vpop.f32.mrb[0].mxu0
    %204 = vmatprep.mubr.f32.mxu0 0.0
    %205 = vmatmul.mubr.f32.gmra.mrb[0].mxu0 %v65
    %v206 = vpop.f32.mrb[0].mxu0
    %v207 = vadd.f32 %v113, %v206
    %v208 = vpop.f32.mrb[0].mxu0
    %209 = vmatprep.mubr.f32.mxu0 0.0
    %210 = vmatmul.mubr.f32.gmra.mrb[0].mxu0 %v66
    %v211 = vpop.f32.mrb[0].mxu0
    %v212 = vadd.f32 %v113, %v211
    %v213 = vpop.f32.mrb[0].mxu0
    %214 = vmatprep.mubr.f32.mxu0 0.0
    %215 = vmatmul.mubr.f32.gmra.mrb[0].mxu0 %v67
    %v216 = vpop.f32.mrb[0].mxu0
    %v217 = vadd.f32 %v113, %v216
    %v218 = vpop.f32.mrb[0].mxu0
    %219 = vmatprep.mubr.f32.mxu0 0.0
    %220 = vmatmul.mubr.f32.gmra.mrb[0].mxu0 %v68
    %v221 = vpop.f32.mrb[0].mxu0
    %v222 = vadd.f32 %v113, %v221
    %v223 = vpop.f32.mrb[0].mxu0
    %224 = vmatprep.mubr.f32.mxu0 0.0
    %225 = vmatmul.mubr.f32.gmra.mrb[0].mxu0 %v69
    %v226 = vpop.f32.mrb[0].mxu0
    %v227 = vadd.f32 %v113, %v226
    %v228 = vpop.f32.mrb[0].mxu0
    %229 = vmatprep.mubr.f32.mxu0 0.0
    %230 = vmatmul.mubr.f32.gmra.mrb[0].mxu0 %v70
    %v231 = vpop.f32.mrb[0].mxu0
    %v232 = vadd.f32 %v113, %v231
    %v233 = vpop.f32.mrb[0].mxu0
    %234 = vmatprep.mubr.f32.mxu0 0.0
    %235 = vmatmul.mubr.f32.gmra.mrb[0].mxu0 %v71
    %v236 = vpop.f32.mrb[0].mxu0
    %v237 = vadd.f32 %v113, %v236
    %v238 = vpop.f32.mrb[0].mxu0
    %239 = vmatprep.mubr.f32.mxu0 0.0
    %240 = vmatmul.mubr.f32.gmra.mrb[0].mxu0 %v72
    %v241 = vpop.f32.mrb[0].mxu0
    %v242 = vadd.f32 %v113, %v241
    %v243 = vpop.f32.mrb[0].mxu0
    %244 = vmatprep.mubr.f32.mxu0 0.0
    %245 = vmatmul.mubr.f32.gmra.mrb[0].mxu0 %v73
    %v246 = vpop.f32.mrb[0].mxu0
    %v247 = vadd.f32 %v113, %v246
    %v248 = vpop.f32.mrb[0].mxu0
    %249 = vmatprep.mubr.f32.mxu0 0.0
    %250 = vmatmul.mubr.f32.gmra.mrb[0].mxu0 %v74
    %v251 = vpop.f32.mrb[0].mxu0
    %v252 = vadd.f32 %v113, %v251
    %v253 = vpop.f32.mrb[0].mxu0
    %254 = vmatprep.mubr.f32.mxu0 0.0
    %255 = vmatmul.mubr.f32.gmra.mrb[0].mxu0 %v75
    %v256 = vpop.f32.mrb[0].mxu0
    %v257 = vadd.f32 %v113, %v256
    %v258 = vpop.f32.mrb[0].mxu0
    %259 = vmatprep.mubr.f32.mxu0 0.0
    %260 = vmatmul.mubr.f32.gmra.mrb[0].mxu0 %v76
    %v261 = vpop.f32.mrb[0].mxu0
    %v262 = vadd.f32 %v113, %v261
    %v263 = vpop.f32.mrb[0].mxu0
    %264 = vmatprep.mubr.f32.mxu0 0.0
    %265 = vmatmul.mubr.f32.gmra.mrb[0].mxu0 %v77
    %v266 = vpop.f32.mrb[0].mxu0
    %v267 = vadd.f32 %v113, %v266
    %v268 = vpop.f32.mrb[0].mxu0
    %269 = vmatprep.mubr.f32.mxu0 0.0
    %270 = vmatmul.mubr.f32.gmra.mrb[0].mxu0 %v78
    %v271 = vpop.f32.mrb[0].mxu0
    %v272 = vadd.f32 %v113, %v271
    %v273 = vpop.f32.mrb[0].mxu0
    %274 = vmatprep.mubr.f32.mxu0 0.0
    %275 = vmatmul.mubr.f32.gmra.mrb[0].mxu0 %v79
    %v276 = vpop.f32.mrb[0].mxu0
    %v277 = vadd.f32 %v113, %v276
    %v278 = vpop.f32.mrb[0].mxu0
    %279 = vmatprep.mubr.f32.mxu0 0.0
    %280 = vmatmul.mubr.f32.gmra.mrb[0].mxu0 %v80
    %v281 = vpop.f32.mrb[0].mxu0
    %v282 = vadd.f32 %v113, %v281
    %v283 = vpop.f32.mrb[0].mxu0
    %284 = vmatprep.mubr.f32.mxu0 0.0
    %285 = vmatmul.mubr.f32.gmra.mrb[0].mxu0 %v81
    %v286 = vpop.f32.mrb[0].mxu0
    %v287 = vadd.f32 %v113, %v286
    %v288 = vpop.f32.mrb[0].mxu0
    %289 = vmatprep.mubr.f32.mxu0 0.0
    %290 = vmatmul.mubr.f32.gmra.mrb[0].mxu0 %v82
    %v291 = vpop.f32.mrb[0].mxu0
    %v292 = vadd.f32 %v113, %v291
    %v293 = vpop.f32.mrb[0].mxu0
    %294 = vmatprep.mubr.f32.mxu0 0.0
    %295 = vmatmul.mubr.f32.gmra.mrb[0].mxu0 %v83
    %v296 = vpop.f32.mrb[0].mxu0
    %v297 = vadd.f32 %v113, %v296
    %v298 = vpop.f32.mrb[0].mxu0
    %299 = vmatprep.mubr.f32.mxu0 0.0
    %300 = vmatmul.mubr.f32.gmra.mrb[0].mxu0 %v84
    %v301 = vpop.f32.mrb[0].mxu0
    %v302 = vadd.f32 %v113, %v301
    %v303 = vpop.f32.mrb[0].mxu0
    %304 = vmatprep.mubr.f32.mxu0 0.0
    %305 = vmatmul.mubr.f32.gmra.mrb[0].mxu0 %v85
    %v306 = vpop.f32.mrb[0].mxu0
    %v307 = vadd.f32 %v113, %v306
    %v308 = vpop.f32.mrb[0].mxu0
    %309 = vmatprep.mubr.f32.mxu0 0.0
    %310 = vmatmul.mubr.f32.gmra.mrb[0].mxu0 %v86
    %v311 = vpop.f32.mrb[0].mxu0
    %v312 = vadd.f32 %v113, %v311
    %v313 = vpop.f32.mrb[0].mxu0
    %314 = vmatprep.mubr.f32.mxu0 0.0
    %315 = vmatmul.mubr.f32.gmra.mrb[0].mxu0 %v87
    %v316 = vpop.f32.mrb[0].mxu0
    %v317 = vadd.f32 %v113, %v316
    %v318 = vpop.f32.mrb[0].mxu0
    %319 = vmatprep.mubr.f32.mxu0 0.0
    %320 = vmatmul.mubr.f32.gmra.mrb[0].mxu0 %v88
    %v321 = vpop.f32.mrb[0].mxu0
    %v322 = vadd.f32 %v113, %v321
    %v323 = vpop.f32.mrb[0].mxu0
    %324 = vmatprep.mubr.f32.mxu0 0.0
    %325 = vmatmul.mubr.f32.gmra.mrb[0].mxu0 %v89
    %v326 = vpop.f32.mrb[0].mxu0
    %v327 = vadd.f32 %v113, %v326
    %v328 = vpop.f32.mrb[0].mxu0
    %329 = vmatprep.mubr.f32.mxu0 0.0
    %330 = vmatmul.mubr.f32.gmra.mrb[0].mxu0 %v90
    %v331 = vpop.f32.mrb[0].mxu0
    %v332 = vadd.f32 %v113, %v331
    %v333 = vpop.f32.mrb[0].mxu0
    %334 = vmatprep.mubr.f32.mxu0 0.0
    %335 = vmatmul.mubr.f32.gmra.mrb[0].mxu0 %v91
    %v336 = vpop.f32.mrb[0].mxu0
    %v337 = vadd.f32 %v113, %v336
    %v338 = vpop.f32.mrb[0].mxu0
    %339 = vdwg.mxu0
    %340 = vmax.xlane.f32.xlu0 %v182
    %v341 = vpop.xlane.xlu0 %340
    %342 = vmax.xlane.f32.xlu0 %v187
    %v343 = vpop.xlane.xlu0 %342
    %344 = vmax.xlane.f32.xlu0 %v192
    %v345 = vpop.xlane.xlu0 %344
    %346 = vmax.xlane.f32.xlu0 %v197
    %v347 = vpop.xlane.xlu0 %346
    %348 = vmax.xlane.f32.xlu0 %v202
    %v349 = vpop.xlane.xlu0 %348
    %350 = vmax.xlane.f32.xlu0 %v207
    %v351 = vpop.xlane.xlu0 %350
    %352 = vmax.xlane.f32.xlu0 %v212
    %v353 = vpop.xlane.xlu0 %352
    %354 = vmax.xlane.f32.xlu0 %v217
    %v355 = vpop.xlane.xlu0 %354
    %356 = vmax.xlane.f32.xlu0 %v222
    %v357 = vpop.xlane.xlu0 %356
    %358 = vmax.xlane.f32.xlu0 %v227
    %v359 = vpop.xlane.xlu0 %358
    %360 = vmax.xlane.f32.xlu0 %v232
    %v361 = vpop.xlane.xlu0 %360
    %362 = vmax.xlane.f32.xlu0 %v237
    %v363 = vpop.xlane.xlu0 %362
    %364 = vmax.xlane.f32.xlu0 %v242
    %v365 = vpop.xlane.xlu0 %364
    %366 = vmax.xlane.f32.xlu0 %v247
    %v367 = vpop.xlane.xlu0 %366
    %368 = vmax.xlane.f32.xlu0 %v252
    %v369 = vpop.xlane.xlu0 %368
    %370 = vmax.xlane.f32.xlu0 %v257
    %v371 = vpop.xlane.xlu0 %370
    %372 = vmax.xlane.f32.xlu0 %v262
    %v373 = vpop.xlane.xlu0 %372
    %374 = vmax.xlane.f32.xlu0 %v267
    %v375 = vpop.xlane.xlu0 %374
    %376 = vmax.xlane.f32.xlu0 %v272
    %v377 = vpop.xlane.xlu0 %376
    %378 = vmax.xlane.f32.xlu0 %v277
    %v379 = vpop.xlane.xlu0 %378
    %380 = vmax.xlane.f32.xlu0 %v282
    %v381 = vpop.xlane.xlu0 %380
    %382 = vmax.xlane.f32.xlu0 %v287
    %v383 = vpop.xlane.xlu0 %382
    %384 = vmax.xlane.f32.xlu0 %v292
    %v385 = vpop.xlane.xlu0 %384
    %386 = vmax.xlane.f32.xlu0 %v297
    %v387 = vpop.xlane.xlu0 %386
    %388 = vmax.xlane.f32.xlu0 %v302
    %v389 = vpop.xlane.xlu0 %388
    %390 = vmax.xlane.f32.xlu0 %v307
    %v391 = vpop.xlane.xlu0 %390
    %392 = vmax.xlane.f32.xlu0 %v312
    %v393 = vpop.xlane.xlu0 %392
    %394 = vmax.xlane.f32.xlu0 %v317
    %v395 = vpop.xlane.xlu0 %394
    %396 = vmax.xlane.f32.xlu0 %v322
    %v397 = vpop.xlane.xlu0 %396
    %398 = vmax.xlane.f32.xlu0 %v327
    %v399 = vpop.xlane.xlu0 %398
    %400 = vmax.xlane.f32.xlu0 %v332
    %v401 = vpop.xlane.xlu0 %400
    %402 = vmax.xlane.f32.xlu0 %v337
    %v403 = vpop.xlane.xlu0 %402
    %v404 = vsub.f32 %v182, %v341
    %v405 = vsub.f32 %v187, %v343
    %v406 = vsub.f32 %v192, %v345
    %v407 = vsub.f32 %v197, %v347
    %v408 = vsub.f32 %v202, %v349
    %v409 = vsub.f32 %v207, %v351
    %v410 = vsub.f32 %v212, %v353
    %v411 = vsub.f32 %v217, %v355
    %v412 = vsub.f32 %v222, %v357
    %v413 = vsub.f32 %v227, %v359
    %v414 = vsub.f32 %v232, %v361
    %v415 = vsub.f32 %v237, %v363
    %v416 = vsub.f32 %v242, %v365
    %v417 = vsub.f32 %v247, %v367
    %v418 = vsub.f32 %v252, %v369
    %v419 = vsub.f32 %v257, %v371
    %v420 = vsub.f32 %v262, %v373
    %v421 = vsub.f32 %v267, %v375
    %v422 = vsub.f32 %v272, %v377
    %v423 = vsub.f32 %v277, %v379
    %v424 = vsub.f32 %v282, %v381
    %v425 = vsub.f32 %v287, %v383
    %v426 = vsub.f32 %v292, %v385
    %v427 = vsub.f32 %v297, %v387
    %v428 = vsub.f32 %v302, %v389
    %v429 = vsub.f32 %v307, %v391
    %v430 = vsub.f32 %v312, %v393
    %v431 = vsub.f32 %v317, %v395
    %v432 = vsub.f32 %v322, %v397
    %v433 = vsub.f32 %v327, %v399
    %v434 = vsub.f32 %v332, %v401
    %v435 = vsub.f32 %v337, %v403
    %v436 = vmul.f32 %v404, 1.442695
    %v437 = vpow.pop %v436
    %v438 = vmul.f32 %v405, 1.442695
    %v439 = vpow.pop %v438
    %v440 = vmul.f32 %v406, 1.442695
    %v441 = vpow.pop %v440
    %v442 = vmul.f32 %v407, 1.442695
    %v443 = vpow.pop %v442
    %v444 = vmul.f32 %v408, 1.442695
    %v445 = vpow.pop %v444
    %v446 = vmul.f32 %v409, 1.442695
    %v447 = vpow.pop %v446
    %v448 = vmul.f32 %v410, 1.442695
    %v449 = vpow.pop %v448
    %v450 = vmul.f32 %v411, 1.442695
    %v451 = vpow.pop %v450
    %v452 = vmul.f32 %v412, 1.442695
    %v453 = vpow.pop %v452
    %v454 = vmul.f32 %v413, 1.442695
    %v455 = vpow.pop %v454
    %v456 = vmul.f32 %v414, 1.442695
    %v457 = vpow.pop %v456
    %v458 = vmul.f32 %v415, 1.442695
    %v459 = vpow.pop %v458
    %v460 = vmul.f32 %v416, 1.442695
    %v461 = vpow.pop %v460
    %v462 = vmul.f32 %v417, 1.442695
    %v463 = vpow.pop %v462
    %v464 = vmul.f32 %v418, 1.442695
    %v465 = vpow.pop %v464
    %v466 = vmul.f32 %v419, 1.442695
    %v467 = vpow.pop %v466
    %v468 = vmul.f32 %v420, 1.442695
    %v469 = vpow.pop %v468
    %v470 = vmul.f32 %v421, 1.442695
    %v471 = vpow.pop %v470
    %v472 = vmul.f32 %v422, 1.442695
    %v473 = vpow.pop %v472
    %v474 = vmul.f32 %v423, 1.442695
    %v475 = vpow.pop %v474
    %v476 = vmul.f32 %v424, 1.442695
    %v477 = vpow.pop %v476
    %v478 = vmul.f32 %v425, 1.442695
    %v479 = vpow.pop %v478
    %v480 = vmul.f32 %v426, 1.442695
    %v481 = vpow.pop %v480
    %v482 = vmul.f32 %v427, 1.442695
    %v483 = vpow.pop %v482
    %v484 = vmul.f32 %v428, 1.442695
    %v485 = vpow.pop %v484
    %v486 = vmul.f32 %v429, 1.442695
    %v487 = vpow.pop %v486
    %v488 = vmul.f32 %v430, 1.442695
    %v489 = vpow.pop %v488
    %v490 = vmul.f32 %v431, 1.442695
    %v491 = vpow.pop %v490
    %v492 = vmul.f32 %v432, 1.442695
    %v493 = vpow.pop %v492
    %v494 = vmul.f32 %v433, 1.442695
    %v495 = vpow.pop %v494
    %v496 = vmul.f32 %v434, 1.442695
    %v497 = vpow.pop %v496
    %v498 = vmul.f32 %v435, 1.442695
    %v499 = vpow.pop %v498
    %500 = vadd.xlane.f32.xlu0 %v437
    %v501 = vpop.xlane.xlu0 %500
    %502 = vadd.xlane.f32.xlu0 %v439
    %v503 = vpop.xlane.xlu0 %502
    %504 = vadd.xlane.f32.xlu0 %v441
    %v505 = vpop.xlane.xlu0 %504
    %506 = vadd.xlane.f32.xlu0 %v443
    %v507 = vpop.xlane.xlu0 %506
    %508 = vadd.xlane.f32.xlu0 %v445
    %v509 = vpop.xlane.xlu0 %508
    %510 = vadd.xlane.f32.xlu0 %v447
    %v511 = vpop.xlane.xlu0 %510
    %512 = vadd.xlane.f32.xlu0 %v449
    %v513 = vpop.xlane.xlu0 %512
    %514 = vadd.xlane.f32.xlu0 %v451
    %v515 = vpop.xlane.xlu0 %514
    %516 = vadd.xlane.f32.xlu0 %v453
    %v517 = vpop.xlane.xlu0 %516
    %518 = vadd.xlane.f32.xlu0 %v455
    %v519 = vpop.xlane.xlu0 %518
    %520 = vadd.xlane.f32.xlu0 %v457
    %v521 = vpop.xlane.xlu0 %520
    %522 = vadd.xlane.f32.xlu0 %v459
    %v523 = vpop.xlane.xlu0 %522
    %524 = vadd.xlane.f32.xlu0 %v461
    %v525 = vpop.xlane.xlu0 %524
    %526 = vadd.xlane.f32.xlu0 %v463
    %v527 = vpop.xlane.xlu0 %526
    %528 = vadd.xlane.f32.xlu0 %v465
    %v529 = vpop.xlane.xlu0 %528
    %530 = vadd.xlane.f32.xlu0 %v467
    %v531 = vpop.xlane.xlu0 %530
    %532 = vadd.xlane.f32.xlu0 %v469
    %v533 = vpop.xlane.xlu0 %532
    %534 = vadd.xlane.f32.xlu0 %v471
    %v535 = vpop.xlane.xlu0 %534
    %536 = vadd.xlane.f32.xlu0 %v473
    %v537 = vpop.xlane.xlu0 %536
    %538 = vadd.xlane.f32.xlu0 %v475
    %v539 = vpop.xlane.xlu0 %538
    %540 = vadd.xlane.f32.xlu0 %v477
    %v541 = vpop.xlane.xlu0 %540
    %542 = vadd.xlane.f32.xlu0 %v479
    %v543 = vpop.xlane.xlu0 %542
    %544 = vadd.xlane.f32.xlu0 %v481
    %v545 = vpop.xlane.xlu0 %544
    %546 = vadd.xlane.f32.xlu0 %v483
    %v547 = vpop.xlane.xlu0 %546
    %548 = vadd.xlane.f32.xlu0 %v485
    %v549 = vpop.xlane.xlu0 %548
    %550 = vadd.xlane.f32.xlu0 %v487
    %v551 = vpop.xlane.xlu0 %550
    %552 = vadd.xlane.f32.xlu0 %v489
    %v553 = vpop.xlane.xlu0 %552
    %554 = vadd.xlane.f32.xlu0 %v491
    %v555 = vpop.xlane.xlu0 %554
    %556 = vadd.xlane.f32.xlu0 %v493
    %v557 = vpop.xlane.xlu0 %556
    %558 = vadd.xlane.f32.xlu0 %v495
    %v559 = vpop.xlane.xlu0 %558
    %560 = vadd.xlane.f32.xlu0 %v497
    %v561 = vpop.xlane.xlu0 %560
    %562 = vadd.xlane.f32.xlu0 %v499
    %v563 = vpop.xlane.xlu0 %562
    %v564 = vrcp.pop %v501
    %v565 = vrcp.pop %v503
    %v566 = vrcp.pop %v505
    %v567 = vrcp.pop %v507
    %v568 = vrcp.pop %v509
    %v569 = vrcp.pop %v511
    %v570 = vrcp.pop %v513
    %v571 = vrcp.pop %v515
    %v572 = vrcp.pop %v517
    %v573 = vrcp.pop %v519
    %v574 = vrcp.pop %v521
    %v575 = vrcp.pop %v523
    %v576 = vrcp.pop %v525
    %v577 = vrcp.pop %v527
    %v578 = vrcp.pop %v529
    %v579 = vrcp.pop %v531
    %v580 = vrcp.pop %v533
    %v581 = vrcp.pop %v535
    %v582 = vrcp.pop %v537
    %v583 = vrcp.pop %v539
    %v584 = vrcp.pop %v541
    %v585 = vrcp.pop %v543
    %v586 = vrcp.pop %v545
    %v587 = vrcp.pop %v547
    %v588 = vrcp.pop %v549
    %v589 = vrcp.pop %v551
    %v590 = vrcp.pop %v553
    %v591 = vrcp.pop %v555
    %v592 = vrcp.pop %v557
    %v593 = vrcp.pop %v559
    %v594 = vrcp.pop %v561
    %v595 = vrcp.pop %v563
    %v596 = vmul.f32 %v437, %v564
    %v597 = vmul.f32 %v439, %v565
    %v598 = vmul.f32 %v441, %v566
    %v599 = vmul.f32 %v443, %v567
    %v600 = vmul.f32 %v445, %v568
    %v601 = vmul.f32 %v447, %v569
    %v602 = vmul.f32 %v449, %v570
    %v603 = vmul.f32 %v451, %v571
    %v604 = vmul.f32 %v453, %v572
    %v605 = vmul.f32 %v455, %v573
    %v606 = vmul.f32 %v457, %v574
    %v607 = vmul.f32 %v459, %v575
    %v608 = vmul.f32 %v461, %v576
    %v609 = vmul.f32 %v463, %v577
    %v610 = vmul.f32 %v465, %v578
    %v611 = vmul.f32 %v467, %v579
    %v612 = vmul.f32 %v469, %v580
    %v613 = vmul.f32 %v471, %v581
    %v614 = vmul.f32 %v473, %v582
    %v615 = vmul.f32 %v475, %v583
    %v616 = vmul.f32 %v477, %v584
    %v617 = vmul.f32 %v479, %v585
    %v618 = vmul.f32 %v481, %v586
    %v619 = vmul.f32 %v483, %v587
    %v620 = vmul.f32 %v485, %v588
    %v621 = vmul.f32 %v487, %v589
    %v622 = vmul.f32 %v489, %v590
    %v623 = vmul.f32 %v491, %v591
    %v624 = vmul.f32 %v493, %v592
    %v625 = vmul.f32 %v495, %v593
    %v626 = vmul.f32 %v497, %v594
    %v627 = vmul.f32 %v499, %v595
    %v628 = vmul.f32 %v596, %v56
    %v629 = vmul.f32 %v597, %v56
    %v630 = vmul.f32 %v598, %v56
    %v631 = vmul.f32 %v599, %v56
    %v632 = vmul.f32 %v600, %v56
    %v633 = vmul.f32 %v601, %v56
    %v634 = vmul.f32 %v602, %v56
    %v635 = vmul.f32 %v603, %v56
    %v636 = vmul.f32 %v604, %v56
    %v637 = vmul.f32 %v605, %v56
    %v638 = vmul.f32 %v606, %v56
    %v639 = vmul.f32 %v607, %v56
    %v640 = vmul.f32 %v608, %v56
    %v641 = vmul.f32 %v609, %v56
    %v642 = vmul.f32 %v610, %v56
    %v643 = vmul.f32 %v611, %v56
    %v644 = vmul.f32 %v612, %v56
    %v645 = vmul.f32 %v613, %v56
    %v646 = vmul.f32 %v614, %v56
    %v647 = vmul.f32 %v615, %v56
    %v648 = vmul.f32 %v616, %v56
    %v649 = vmul.f32 %v617, %v56
    %v650 = vmul.f32 %v618, %v56
    %v651 = vmul.f32 %v619, %v56
    %v652 = vmul.f32 %v620, %v56
    %v653 = vmul.f32 %v621, %v56
    %v654 = vmul.f32 %v622, %v56
    %v655 = vmul.f32 %v623, %v56
    %v656 = vmul.f32 %v624, %v56
    %v657 = vmul.f32 %v625, %v56
    %v658 = vmul.f32 %v626, %v56
    %v659 = vmul.f32 %v627, %v56
    %660 = vst [vmem:[#allocation7] sm:$0xff] %v628
    %661 = vst [vmem:[#allocation7 + $0x8] sm:$0xff] %v629
    %662 = vst [vmem:[#allocation7 + $0x10] sm:$0xff] %v630
    %663 = vst [vmem:[#allocation7 + $0x18] sm:$0xff] %v631
    %664 = vst [vmem:[#allocation7 + $0x20] sm:$0xff] %v632
    %665 = vst [vmem:[#allocation7 + $0x28] sm:$0xff] %v633
    %666 = vst [vmem:[#allocation7 + $0x30] sm:$0xff] %v634
    %667 = vst [vmem:[#allocation7 + $0x38] sm:$0xff] %v635
    %668 = vst [vmem:[#allocation7 + $0x40] sm:$0xff] %v636
    %669 = vst [vmem:[#allocation7 + $0x48] sm:$0xff] %v637
    %670 = vst [vmem:[#allocation7 + $0x50] sm:$0xff] %v638
    %671 = vst [vmem:[#allocation7 + $0x58] sm:$0xff] %v639
    %672 = vst [vmem:[#allocation7 + $0x60] sm:$0xff] %v640
    %673 = vst [vmem:[#allocation7 + $0x68] sm:$0xff] %v641
    %674 = vst [vmem:[#allocation7 + $0x70] sm:$0xff] %v642
    %675 = vst [vmem:[#allocation7 + $0x78] sm:$0xff] %v643
    %676 = vst [vmem:[#allocation7 + $0x80] sm:$0xff] %v644
    %677 = vst [vmem:[#allocation7 + $0x88] sm:$0xff] %v645
    %678 = vst [vmem:[#allocation7 + $0x90] sm:$0xff] %v646
    %679 = vst [vmem:[#allocation7 + $0x98] sm:$0xff] %v647
    %680 = vst [vmem:[#allocation7 + $0xa0] sm:$0xff] %v648
    %681 = vst [vmem:[#allocation7 + $0xa8] sm:$0xff] %v649
    %682 = vst [vmem:[#allocation7 + $0xb0] sm:$0xff] %v650
    %683 = vst [vmem:[#allocation7 + $0xb8] sm:$0xff] %v651
    %684 = vst [vmem:[#allocation7 + $0xc0] sm:$0xff] %v652
    %685 = vst [vmem:[#allocation7 + $0xc8] sm:$0xff] %v653
    %686 = vst [vmem:[#allocation7 + $0xd0] sm:$0xff] %v654
    %687 = vst [vmem:[#allocation7 + $0xd8] sm:$0xff] %v655
    %688 = vst [vmem:[#allocation7 + $0xe0] sm:$0xff] %v656
    %689 = vst [vmem:[#allocation7 + $0xe8] sm:$0xff] %v657
    %690 = vst [vmem:[#allocation7 + $0xf0] sm:$0xff] %v658
    %691 = vst [vmem:[#allocation7 + $0xf8] sm:$0xff] %v659
    %v692 = vadd.f32 %v628, %v59
    %v693 = vadd.f32 %v629, %v59
    %v694 = vadd.f32 %v630, %v59
    %v695 = vadd.f32 %v631, %v59
    %v696 = vadd.f32 %v632, %v59
    %v697 = vadd.f32 %v633, %v59
    %v698 = vadd.f32 %v634, %v59
    %v699 = vadd.f32 %v635, %v59
    %v700 = vadd.f32 %v636, %v59
    %v701 = vadd.f32 %v637, %v59
    %v702 = vadd.f32 %v638, %v59
    %v703 = vadd.f32 %v639, %v59
    %v704 = vadd.f32 %v640, %v59
    %v705 = vadd.f32 %v641, %v59
    %v706 = vadd.f32 %v642, %v59
    %v707 = vadd.f32 %v643, %v59
    %v708 = vadd.f32 %v644, %v59
    %v709 = vadd.f32 %v645, %v59
    %v710 = vadd.f32 %v646, %v59
    %v711 = vadd.f32 %v647, %v59
    %v712 = vadd.f32 %v648, %v59
    %v713 = vadd.f32 %v649, %v59
    %v714 = vadd.f32 %v650, %v59
    %v715 = vadd.f32 %v651, %v59
    %v716 = vadd.f32 %v652, %v59
    %v717 = vadd.f32 %v653, %v59
    %v718 = vadd.f32 %v654, %v59
    %v719 = vadd.f32 %v655, %v59
    %v720 = vadd.f32 %v656, %v59
    %v721 = vadd.f32 %v657, %v59
    %v722 = vadd.f32 %v658, %v59
    %v723 = vadd.f32 %v659, %v59
    %v724 = vpack.c.bf16 %v693, %v692
    %v725 = vpack.c.bf16 %v695, %v694
    %v726 = vpack.c.bf16 %v697, %v696
    %v727 = vpack.c.bf16 %v699, %v698
    %v728 = vpack.c.bf16 %v701, %v700
    %v729 = vpack.c.bf16 %v703, %v702
    %v730 = vpack.c.bf16 %v705, %v704
    %v731 = vpack.c.bf16 %v707, %v706
    %v732 = vpack.c.bf16 %v709, %v708
    %v733 = vpack.c.bf16 %v711, %v710
    %v734 = vpack.c.bf16 %v713, %v712
    %v735 = vpack.c.bf16 %v715, %v714
    %v736 = vpack.c.bf16 %v717, %v716
    %v737 = vpack.c.bf16 %v719, %v718
    %v738 = vpack.c.bf16 %v721, %v720
    %v739 = vpack.c.bf16 %v723, %v722
    %v756 = vunpack.c.l.b16 %v724
    %v757 = vunpack.c.h.b16 %v724
    %v758 = vunpack.c.l.b16 %v725
    %v759 = vunpack.c.h.b16 %v725
    %v760 = vunpack.c.l.b16 %v726
    %v761 = vunpack.c.h.b16 %v726
    %v762 = vunpack.c.l.b16 %v727
    %v763 = vunpack.c.h.b16 %v727
    %v764 = vunpack.c.l.b16 %v728
    %v765 = vunpack.c.h.b16 %v728
    %v766 = vunpack.c.l.b16 %v729
    %v767 = vunpack.c.h.b16 %v729
    %v768 = vunpack.c.l.b16 %v730
    %v769 = vunpack.c.h.b16 %v730
    %v770 = vunpack.c.l.b16 %v731
    %v771 = vunpack.c.h.b16 %v731
    %v772 = vunpack.c.l.b16 %v732
    %v773 = vunpack.c.h.b16 %v732
    %v774 = vunpack.c.l.b16 %v733
    %v775 = vunpack.c.h.b16 %v733
    %v776 = vunpack.c.l.b16 %v734
    %v777 = vunpack.c.h.b16 %v734
    %v778 = vunpack.c.l.b16 %v735
    %v779 = vunpack.c.h.b16 %v735
    %v780 = vunpack.c.l.b16 %v736
    %v781 = vunpack.c.h.b16 %v736
    %v782 = vunpack.c.l.b16 %v737
    %v783 = vunpack.c.h.b16 %v737
    %v784 = vunpack.c.l.b16 %v738
    %v785 = vunpack.c.h.b16 %v738
    %v786 = vunpack.c.l.b16 %v739
    %v787 = vunpack.c.h.b16 %v739
    %v788 = vpack.c.b16 %v756, %v756
    %v789 = vpack.c.b16 %v757, %v757
    %v790 = vpack.c.b16 %v758, %v758
    %v791 = vpack.c.b16 %v759, %v759
    %v792 = vpack.c.b16 %v760, %v760
    %v793 = vpack.c.b16 %v761, %v761
    %v794 = vpack.c.b16 %v762, %v762
    %v795 = vpack.c.b16 %v763, %v763
    %v796 = vpack.c.b16 %v764, %v764
    %v797 = vpack.c.b16 %v765, %v765
    %v798 = vpack.c.b16 %v766, %v766
    %v799 = vpack.c.b16 %v767, %v767
    %v800 = vpack.c.b16 %v768, %v768
    %v801 = vpack.c.b16 %v769, %v769
    %v802 = vpack.c.b16 %v770, %v770
    %v803 = vpack.c.b16 %v771, %v771
    %v804 = vpack.c.b16 %v772, %v772
    %v805 = vpack.c.b16 %v773, %v773
    %v806 = vpack.c.b16 %v774, %v774
    %v807 = vpack.c.b16 %v775, %v775
    %v808 = vpack.c.b16 %v776, %v776
    %v809 = vpack.c.b16 %v777, %v777
    %v810 = vpack.c.b16 %v778, %v778
    %v811 = vpack.c.b16 %v779, %v779
    %v812 = vpack.c.b16 %v780, %v780
    %v813 = vpack.c.b16 %v781, %v781
    %v814 = vpack.c.b16 %v782, %v782
    %v815 = vpack.c.b16 %v783, %v783
    %v816 = vpack.c.b16 %v784, %v784
    %v817 = vpack.c.b16 %v785, %v785
    %v818 = vpack.c.b16 %v786, %v786
    %v819 = vpack.c.b16 %v787, %v787
    %852 = vst [vmem:[#allocation8] sm:$0xf] %v788
    %853 = vst [vmem:[#allocation8 + $0x4] sm:$0xf] %v789
    %854 = vst [vmem:[#allocation8 + $0x8] sm:$0xf] %v790
    %855 = vst [vmem:[#allocation8 + $0xc] sm:$0xf] %v791
    %856 = vst [vmem:[#allocation8 + $0x10] sm:$0xf] %v792
    %857 = vst [vmem:[#allocation8 + $0x14] sm:$0xf] %v793
    %858 = vst [vmem:[#allocation8 + $0x18] sm:$0xf] %v794
    %859 = vst [vmem:[#allocation8 + $0x1c] sm:$0xf] %v795
    %860 = vst [vmem:[#allocation8 + $0x20] sm:$0xf] %v796
    %861 = vst [vmem:[#allocation8 + $0x24] sm:$0xf] %v797
    %862 = vst [vmem:[#allocation8 + $0x28] sm:$0xf] %v798
    %863 = vst [vmem:[#allocation8 + $0x2c] sm:$0xf] %v799
    %864 = vst [vmem:[#allocation8 + $0x30] sm:$0xf] %v800
    %865 = vst [vmem:[#allocation8 + $0x34] sm:$0xf] %v801
    %866 = vst [vmem:[#allocation8 + $0x38] sm:$0xf] %v802
    %867 = vst [vmem:[#allocation8 + $0x3c] sm:$0xf] %v803
    %868 = vst [vmem:[#allocation8 + $0x40] sm:$0xf] %v804
    %869 = vst [vmem:[#allocation8 + $0x44] sm:$0xf] %v805
    %870 = vst [vmem:[#allocation8 + $0x48] sm:$0xf] %v806
    %871 = vst [vmem:[#allocation8 + $0x4c] sm:$0xf] %v807
    %872 = vst [vmem:[#allocation8 + $0x50] sm:$0xf] %v808
    %873 = vst [vmem:[#allocation8 + $0x54] sm:$0xf] %v809
    %874 = vst [vmem:[#allocation8 + $0x58] sm:$0xf] %v810
    %875 = vst [vmem:[#allocation8 + $0x5c] sm:$0xf] %v811
    %876 = vst [vmem:[#allocation8 + $0x60] sm:$0xf] %v812
    %877 = vst [vmem:[#allocation8 + $0x64] sm:$0xf] %v813
    %878 = vst [vmem:[#allocation8 + $0x68] sm:$0xf] %v814
    %879 = vst [vmem:[#allocation8 + $0x6c] sm:$0xf] %v815
    %880 = vst [vmem:[#allocation8 + $0x70] sm:$0xf] %v816
    %881 = vst [vmem:[#allocation8 + $0x74] sm:$0xf] %v817
    %882 = vst [vmem:[#allocation8 + $0x78] sm:$0xf] %v818
    %883 = vst [vmem:[#allocation8 + $0x7c] sm:$0xf] %v819
    %v884 = vmul.f32 %v628, %v628
    %v885 = vmul.f32 %v629, %v629
    %v886 = vmul.f32 %v630, %v630
    %v887 = vmul.f32 %v631, %v631
    %v888 = vmul.f32 %v632, %v632
    %v889 = vmul.f32 %v633, %v633
    %v890 = vmul.f32 %v634, %v634
    %v891 = vmul.f32 %v635, %v635
    %v892 = vmul.f32 %v636, %v636
    %v893 = vmul.f32 %v637, %v637
    %v894 = vmul.f32 %v638, %v638
    %v895 = vmul.f32 %v639, %v639
    %v896 = vmul.f32 %v640, %v640
    %v897 = vmul.f32 %v641, %v641
    %v898 = vmul.f32 %v642, %v642
    %v899 = vmul.f32 %v643, %v643
    %v900 = vmul.f32 %v644, %v644
    %v901 = vmul.f32 %v645, %v645
    %v902 = vmul.f32 %v646, %v646
    %v903 = vmul.f32 %v647, %v647
    %v904 = vmul.f32 %v648, %v648
    %v905 = vmul.f32 %v649, %v649
    %v906 = vmul.f32 %v650, %v650
    %v907 = vmul.f32 %v651, %v651
    %v908 = vmul.f32 %v652, %v652
    %v909 = vmul.f32 %v653, %v653
    %v910 = vmul.f32 %v654, %v654
    %v911 = vmul.f32 %v655, %v655
    %v912 = vmul.f32 %v656, %v656
    %v913 = vmul.f32 %v657, %v657
    %v914 = vmul.f32 %v658, %v658
    %v915 = vmul.f32 %v659, %v659
    %916 = vadd.xlane.f32.xlu0 %v884
    %v917 = vpop.xlane.xlu0 %916
    %918 = vadd.xlane.f32.xlu0 %v885
    %v919 = vpop.xlane.xlu0 %918
    %920 = vadd.xlane.f32.xlu0 %v886
    %v921 = vpop.xlane.xlu0 %920
    %922 = vadd.xlane.f32.xlu0 %v887
    %v923 = vpop.xlane.xlu0 %922
    %924 = vadd.xlane.f32.xlu0 %v888
    %v925 = vpop.xlane.xlu0 %924
    %926 = vadd.xlane.f32.xlu0 %v889
    %v927 = vpop.xlane.xlu0 %926
    %928 = vadd.xlane.f32.xlu0 %v890
    %v929 = vpop.xlane.xlu0 %928
    %930 = vadd.xlane.f32.xlu0 %v891
    %v931 = vpop.xlane.xlu0 %930
    %932 = vadd.xlane.f32.xlu0 %v892
    %v933 = vpop.xlane.xlu0 %932
    %934 = vadd.xlane.f32.xlu0 %v893
    %v935 = vpop.xlane.xlu0 %934
    %936 = vadd.xlane.f32.xlu0 %v894
    %v937 = vpop.xlane.xlu0 %936
    %938 = vadd.xlane.f32.xlu0 %v895
    %v939 = vpop.xlane.xlu0 %938
    %940 = vadd.xlane.f32.xlu0 %v896
    %v941 = vpop.xlane.xlu0 %940
    %942 = vadd.xlane.f32.xlu0 %v897
    %v943 = vpop.xlane.xlu0 %942
    %944 = vadd.xlane.f32.xlu0 %v898
    %v945 = vpop.xlane.xlu0 %944
    %946 = vadd.xlane.f32.xlu0 %v899
    %v947 = vpop.xlane.xlu0 %946
    %948 = vadd.xlane.f32.xlu0 %v900
    %v949 = vpop.xlane.xlu0 %948
    %950 = vadd.xlane.f32.xlu0 %v901
    %v951 = vpop.xlane.xlu0 %950
    %952 = vadd.xlane.f32.xlu0 %v902
    %v953 = vpop.xlane.xlu0 %952
    %954 = vadd.xlane.f32.xlu0 %v903
    %v955 = vpop.xlane.xlu0 %954
    %956 = vadd.xlane.f32.xlu0 %v904
    %v957 = vpop.xlane.xlu0 %956
    %958 = vadd.xlane.f32.xlu0 %v905
    %v959 = vpop.xlane.xlu0 %958
    %960 = vadd.xlane.f32.xlu0 %v906
    %v961 = vpop.xlane.xlu0 %960
    %962 = vadd.xlane.f32.xlu0 %v907
    %v963 = vpop.xlane.xlu0 %962
    %964 = vadd.xlane.f32.xlu0 %v908
    %v965 = vpop.xlane.xlu0 %964
    %966 = vadd.xlane.f32.xlu0 %v909
    %v967 = vpop.xlane.xlu0 %966
    %968 = vadd.xlane.f32.xlu0 %v910
    %v969 = vpop.xlane.xlu0 %968
    %970 = vadd.xlane.f32.xlu0 %v911
    %v971 = vpop.xlane.xlu0 %970
    %972 = vadd.xlane.f32.xlu0 %v912
    %v973 = vpop.xlane.xlu0 %972
    %974 = vadd.xlane.f32.xlu0 %v913
    %v975 = vpop.xlane.xlu0 %974
    %976 = vadd.xlane.f32.xlu0 %v914
    %v977 = vpop.xlane.xlu0 %976
    %978 = vadd.xlane.f32.xlu0 %v915
    %v979 = vpop.xlane.xlu0 %978
    %v980 = vmul.f32 %v59, %v917
    %v981 = vmul.f32 %v59, %v919
    %v982 = vmul.f32 %v59, %v921
    %v983 = vmul.f32 %v59, %v923
    %v984 = vmul.f32 %v59, %v925
    %v985 = vmul.f32 %v59, %v927
    %v986 = vmul.f32 %v59, %v929
    %v987 = vmul.f32 %v59, %v931
    %v988 = vmul.f32 %v59, %v933
    %v989 = vmul.f32 %v59, %v935
    %v990 = vmul.f32 %v59, %v937
    %v991 = vmul.f32 %v59, %v939
    %v992 = vmul.f32 %v59, %v941
    %v993 = vmul.f32 %v59, %v943
    %v994 = vmul.f32 %v59, %v945
    %v995 = vmul.f32 %v59, %v947
    %v996 = vmul.f32 %v59, %v949
    %v997 = vmul.f32 %v59, %v951
    %v998 = vmul.f32 %v59, %v953
    %v999 = vmul.f32 %v59, %v955
    %v1000 = vmul.f32 %v59, %v957
    %v1001 = vmul.f32 %v59, %v959
    %v1002 = vmul.f32 %v59, %v961
    %v1003 = vmul.f32 %v59, %v963
    %v1004 = vmul.f32 %v59, %v965
    %v1005 = vmul.f32 %v59, %v967
    %v1006 = vmul.f32 %v59, %v969
    %v1007 = vmul.f32 %v59, %v971
    %v1008 = vmul.f32 %v59, %v973
    %v1009 = vmul.f32 %v59, %v975
    %v1010 = vmul.f32 %v59, %v977
    %v1011 = vmul.f32 %v59, %v979
    %v1012 = vadd.f32 %v628, %v980
    %v1013 = vadd.f32 %v629, %v981
    %v1014 = vadd.f32 %v630, %v982
    %v1015 = vadd.f32 %v631, %v983
    %v1016 = vadd.f32 %v632, %v984
    %v1017 = vadd.f32 %v633, %v985
    %v1018 = vadd.f32 %v634, %v986
    %v1019 = vadd.f32 %v635, %v987
    %v1020 = vadd.f32 %v636, %v988
    %v1021 = vadd.f32 %v637, %v989
    %v1022 = vadd.f32 %v638, %v990
    %v1023 = vadd.f32 %v639, %v991
    %v1024 = vadd.f32 %v640, %v992
    %v1025 = vadd.f32 %v641, %v993
    %v1026 = vadd.f32 %v642, %v994
    %v1027 = vadd.f32 %v643, %v995
    %v1028 = vadd.f32 %v644, %v996
    %v1029 = vadd.f32 %v645, %v997
    %v1030 = vadd.f32 %v646, %v998
    %v1031 = vadd.f32 %v647, %v999
    %v1032 = vadd.f32 %v648, %v1000
    %v1033 = vadd.f32 %v649, %v1001
    %v1034 = vadd.f32 %v650, %v1002
    %v1035 = vadd.f32 %v651, %v1003
    %v1036 = vadd.f32 %v652, %v1004
    %v1037 = vadd.f32 %v653, %v1005
    %v1038 = vadd.f32 %v654, %v1006
    %v1039 = vadd.f32 %v655, %v1007
    %v1040 = vadd.f32 %v656, %v1008
    %v1041 = vadd.f32 %v657, %v1009
    %v1042 = vadd.f32 %v658, %v1010
    %v1043 = vadd.f32 %v659, %v1011
    %1044 = vst [vmem:[#allocation10] sm:$0xff] %v1012
    %1045 = vst [vmem:[#allocation10 + $0x8] sm:$0xff] %v1013
    %1046 = vst [vmem:[#allocation10 + $0x10] sm:$0xff] %v1014
    %1047 = vst [vmem:[#allocation10 + $0x18] sm:$0xff] %v1015
    %1048 = vst [vmem:[#allocation10 + $0x20] sm:$0xff] %v1016
    %1049 = vst [vmem:[#allocation10 + $0x28] sm:$0xff] %v1017
    %1050 = vst [vmem:[#allocation10 + $0x30] sm:$0xff] %v1018
    %1051 = vst [vmem:[#allocation10 + $0x38] sm:$0xff] %v1019
    %1052 = vst [vmem:[#allocation10 + $0x40] sm:$0xff] %v1020
    %1053 = vst [vmem:[#allocation10 + $0x48] sm:$0xff] %v1021
    %1054 = vst [vmem:[#allocation10 + $0x50] sm:$0xff] %v1022
    %1055 = vst [vmem:[#allocation10 + $0x58] sm:$0xff] %v1023
    %1056 = vst [vmem:[#allocation10 + $0x60] sm:$0xff] %v1024
    %1057 = vst [vmem:[#allocation10 + $0x68] sm:$0xff] %v1025
    %1058 = vst [vmem:[#allocation10 + $0x70] sm:$0xff] %v1026
    %1059 = vst [vmem:[#allocation10 + $0x78] sm:$0xff] %v1027
    %1060 = vst [vmem:[#allocation10 + $0x80] sm:$0xff] %v1028
    %1061 = vst [vmem:[#allocation10 + $0x88] sm:$0xff] %v1029
    %1062 = vst [vmem:[#allocation10 + $0x90] sm:$0xff] %v1030
    %1063 = vst [vmem:[#allocation10 + $0x98] sm:$0xff] %v1031
    %1064 = vst [vmem:[#allocation10 + $0xa0] sm:$0xff] %v1032
    %1065 = vst [vmem:[#allocation10 + $0xa8] sm:$0xff] %v1033
    %1066 = vst [vmem:[#allocation10 + $0xb0] sm:$0xff] %v1034
    %1067 = vst [vmem:[#allocation10 + $0xb8] sm:$0xff] %v1035
    %1068 = vst [vmem:[#allocation10 + $0xc0] sm:$0xff] %v1036
    %1069 = vst [vmem:[#allocation10 + $0xc8] sm:$0xff] %v1037
    %1070 = vst [vmem:[#allocation10 + $0xd0] sm:$0xff] %v1038
    %1071 = vst [vmem:[#allocation10 + $0xd8] sm:$0xff] %v1039
    %1072 = vst [vmem:[#allocation10 + $0xe0] sm:$0xff] %v1040
    %1073 = vst [vmem:[#allocation10 + $0xe8] sm:$0xff] %v1041
    %1074 = vst [vmem:[#allocation10 + $0xf0] sm:$0xff] %v1042
    %1075 = vst [vmem:[#allocation10 + $0xf8] sm:$0xff] %v1043
    %v1076 = vadd.f32 %v628, %v629
    %v1077 = vadd.f32 %v1076, %v630
    %v1078 = vadd.f32 %v1077, %v631
    %v1079 = vadd.f32 %v1078, %v632
    %v1080 = vadd.f32 %v1079, %v633
    %v1081 = vadd.f32 %v1080, %v634
    %v1082 = vadd.f32 %v1081, %v635
    %v1083 = vadd.f32 %v1082, %v636
    %v1084 = vadd.f32 %v1083, %v637
    %v1085 = vadd.f32 %v1084, %v638
    %v1086 = vadd.f32 %v1085, %v639
    %v1087 = vadd.f32 %v1086, %v640
    %v1088 = vadd.f32 %v1087, %v641
    %v1089 = vadd.f32 %v1088, %v642
    %v1090 = vadd.f32 %v1089, %v643
    %v1091 = vadd.f32 %v1090, %v644
    %v1092 = vadd.f32 %v1091, %v645
    %v1093 = vadd.f32 %v1092, %v646
    %v1094 = vadd.f32 %v1093, %v647
    %v1095 = vadd.f32 %v1094, %v648
    %v1096 = vadd.f32 %v1095, %v649
    %v1097 = vadd.f32 %v1096, %v650
    %v1098 = vadd.f32 %v1097, %v651
    %v1099 = vadd.f32 %v1098, %v652
    %v1100 = vadd.f32 %v1099, %v653
    %v1101 = vadd.f32 %v1100, %v654
    %v1102 = vadd.f32 %v1101, %v655
    %v1103 = vadd.f32 %v1102, %v656
    %v1104 = vadd.f32 %v1103, %v657
    %v1105 = vadd.f32 %v1104, %v658
    %v1106 = vadd.f32 %v1105, %v659
    %v1107 = vrot.slane %v1106, 4
    %v1108 = vadd.f32 %v1106, %v1107
    %v1109 = vrot.slane %v1108, 2
    %v1110 = vadd.f32 %v1108, %v1109
    %v1111 = vrot.slane %v1110, 1
    %v1112 = vadd.f32 %v1110, %v1111
    %v1113 = vsub.f32 1.0, %v56
    %v1114 = vadd.f32 %v1112, %v1113
    %v1115 = vrcp.pop %v1114
    %v1116 = vmul.f32 %v56, %v1115
    %v1117 = vmul.f32 %v628, %v1116
    %v1118 = vmul.f32 %v629, %v1116
    %v1119 = vmul.f32 %v630, %v1116
    %v1120 = vmul.f32 %v631, %v1116
    %v1121 = vmul.f32 %v632, %v1116
    %v1122 = vmul.f32 %v633, %v1116
    %v1123 = vmul.f32 %v634, %v1116
    %v1124 = vmul.f32 %v635, %v1116
    %v1125 = vmul.f32 %v636, %v1116
    %v1126 = vmul.f32 %v637, %v1116
    %v1127 = vmul.f32 %v638, %v1116
    %v1128 = vmul.f32 %v639, %v1116
    %v1129 = vmul.f32 %v640, %v1116
    %v1130 = vmul.f32 %v641, %v1116
    %v1131 = vmul.f32 %v642, %v1116
    %v1132 = vmul.f32 %v643, %v1116
    %v1133 = vmul.f32 %v644, %v1116
    %v1134 = vmul.f32 %v645, %v1116
    %v1135 = vmul.f32 %v646, %v1116
    %v1136 = vmul.f32 %v647, %v1116
    %v1137 = vmul.f32 %v648, %v1116
    %v1138 = vmul.f32 %v649, %v1116
    %v1139 = vmul.f32 %v650, %v1116
    %v1140 = vmul.f32 %v651, %v1116
    %v1141 = vmul.f32 %v652, %v1116
    %v1142 = vmul.f32 %v653, %v1116
    %v1143 = vmul.f32 %v654, %v1116
    %v1144 = vmul.f32 %v655, %v1116
    %v1145 = vmul.f32 %v656, %v1116
    %v1146 = vmul.f32 %v657, %v1116
    %v1147 = vmul.f32 %v658, %v1116
    %v1148 = vmul.f32 %v659, %v1116
    %v1149 = vpack.c.bf16 %v1118, %v1117
    %v1150 = vpack.c.bf16 %v1120, %v1119
    %v1151 = vpack.c.bf16 %v1122, %v1121
    %v1152 = vpack.c.bf16 %v1124, %v1123
    %v1153 = vpack.c.bf16 %v1126, %v1125
    %v1154 = vpack.c.bf16 %v1128, %v1127
    %v1155 = vpack.c.bf16 %v1130, %v1129
    %v1156 = vpack.c.bf16 %v1132, %v1131
    %v1157 = vpack.c.bf16 %v1134, %v1133
    %v1158 = vpack.c.bf16 %v1136, %v1135
    %v1159 = vpack.c.bf16 %v1138, %v1137
    %v1160 = vpack.c.bf16 %v1140, %v1139
    %v1161 = vpack.c.bf16 %v1142, %v1141
    %v1162 = vpack.c.bf16 %v1144, %v1143
    %v1163 = vpack.c.bf16 %v1146, %v1145
    %v1164 = vpack.c.bf16 %v1148, %v1147
    %v1181 = vunpack.c.l.b16 %v1149
    %v1182 = vunpack.c.h.b16 %v1149
    %v1183 = vunpack.c.l.b16 %v1150
    %v1184 = vunpack.c.h.b16 %v1150
    %v1185 = vunpack.c.l.b16 %v1151
    %v1186 = vunpack.c.h.b16 %v1151
    %v1187 = vunpack.c.l.b16 %v1152
    %v1188 = vunpack.c.h.b16 %v1152
    %v1189 = vunpack.c.l.b16 %v1153
    %v1190 = vunpack.c.h.b16 %v1153
    %v1191 = vunpack.c.l.b16 %v1154
    %v1192 = vunpack.c.h.b16 %v1154
    %v1193 = vunpack.c.l.b16 %v1155
    %v1194 = vunpack.c.h.b16 %v1155
    %v1195 = vunpack.c.l.b16 %v1156
    %v1196 = vunpack.c.h.b16 %v1156
    %v1197 = vunpack.c.l.b16 %v1157
    %v1198 = vunpack.c.h.b16 %v1157
    %v1199 = vunpack.c.l.b16 %v1158
    %v1200 = vunpack.c.h.b16 %v1158
    %v1201 = vunpack.c.l.b16 %v1159
    %v1202 = vunpack.c.h.b16 %v1159
    %v1203 = vunpack.c.l.b16 %v1160
    %v1204 = vunpack.c.h.b16 %v1160
    %v1205 = vunpack.c.l.b16 %v1161
    %v1206 = vunpack.c.h.b16 %v1161
    %v1207 = vunpack.c.l.b16 %v1162
    %v1208 = vunpack.c.h.b16 %v1162
    %v1209 = vunpack.c.l.b16 %v1163
    %v1210 = vunpack.c.h.b16 %v1163
    %v1211 = vunpack.c.l.b16 %v1164
    %v1212 = vunpack.c.h.b16 %v1164
    %v1213 = vpack.c.b16 %v1181, %v1181
    %v1214 = vpack.c.b16 %v1182, %v1182
    %v1215 = vpack.c.b16 %v1183, %v1183
    %v1216 = vpack.c.b16 %v1184, %v1184
    %v1217 = vpack.c.b16 %v1185, %v1185
    %v1218 = vpack.c.b16 %v1186, %v1186
    %v1219 = vpack.c.b16 %v1187, %v1187
    %v1220 = vpack.c.b16 %v1188, %v1188
    %v1221 = vpack.c.b16 %v1189, %v1189
    %v1222 = vpack.c.b16 %v1190, %v1190
    %v1223 = vpack.c.b16 %v1191, %v1191
    %v1224 = vpack.c.b16 %v1192, %v1192
    %v1225 = vpack.c.b16 %v1193, %v1193
    %v1226 = vpack.c.b16 %v1194, %v1194
    %v1227 = vpack.c.b16 %v1195, %v1195
    %v1228 = vpack.c.b16 %v1196, %v1196
    %v1229 = vpack.c.b16 %v1197, %v1197
    %v1230 = vpack.c.b16 %v1198, %v1198
    %v1231 = vpack.c.b16 %v1199, %v1199
    %v1232 = vpack.c.b16 %v1200, %v1200
    %v1233 = vpack.c.b16 %v1201, %v1201
    %v1234 = vpack.c.b16 %v1202, %v1202
    %v1235 = vpack.c.b16 %v1203, %v1203
    %v1236 = vpack.c.b16 %v1204, %v1204
    %v1237 = vpack.c.b16 %v1205, %v1205
    %v1238 = vpack.c.b16 %v1206, %v1206
    %v1239 = vpack.c.b16 %v1207, %v1207
    %v1240 = vpack.c.b16 %v1208, %v1208
    %v1241 = vpack.c.b16 %v1209, %v1209
    %v1242 = vpack.c.b16 %v1210, %v1210
    %v1243 = vpack.c.b16 %v1211, %v1211
    %v1244 = vpack.c.b16 %v1212, %v1212
    %1277 = vst [vmem:[#allocation11] sm:$0xf] %v1213
    %1278 = vst [vmem:[#allocation11 + $0x4] sm:$0xf] %v1214
    %1279 = vst [vmem:[#allocation11 + $0x8] sm:$0xf] %v1215
    %1280 = vst [vmem:[#allocation11 + $0xc] sm:$0xf] %v1216
    %1281 = vst [vmem:[#allocation11 + $0x10] sm:$0xf] %v1217
    %1282 = vst [vmem:[#allocation11 + $0x14] sm:$0xf] %v1218
    %1283 = vst [vmem:[#allocation11 + $0x18] sm:$0xf] %v1219
    %1284 = vst [vmem:[#allocation11 + $0x1c] sm:$0xf] %v1220
    %1285 = vst [vmem:[#allocation11 + $0x20] sm:$0xf] %v1221
    %1286 = vst [vmem:[#allocation11 + $0x24] sm:$0xf] %v1222
    %1287 = vst [vmem:[#allocation11 + $0x28] sm:$0xf] %v1223
    %1288 = vst [vmem:[#allocation11 + $0x2c] sm:$0xf] %v1224
    %1289 = vst [vmem:[#allocation11 + $0x30] sm:$0xf] %v1225
    %1290 = vst [vmem:[#allocation11 + $0x34] sm:$0xf] %v1226
    %1291 = vst [vmem:[#allocation11 + $0x38] sm:$0xf] %v1227
    %1292 = vst [vmem:[#allocation11 + $0x3c] sm:$0xf] %v1228
    %1293 = vst [vmem:[#allocation11 + $0x40] sm:$0xf] %v1229
    %1294 = vst [vmem:[#allocation11 + $0x44] sm:$0xf] %v1230
    %1295 = vst [vmem:[#allocation11 + $0x48] sm:$0xf] %v1231
    %1296 = vst [vmem:[#allocation11 + $0x4c] sm:$0xf] %v1232
    %1297 = vst [vmem:[#allocation11 + $0x50] sm:$0xf] %v1233
    %1298 = vst [vmem:[#allocation11 + $0x54] sm:$0xf] %v1234
    %1299 = vst [vmem:[#allocation11 + $0x58] sm:$0xf] %v1235
    %1300 = vst [vmem:[#allocation11 + $0x5c] sm:$0xf] %v1236
    %1301 = vst [vmem:[#allocation11 + $0x60] sm:$0xf] %v1237
    %1302 = vst [vmem:[#allocation11 + $0x64] sm:$0xf] %v1238
    %1303 = vst [vmem:[#allocation11 + $0x68] sm:$0xf] %v1239
    %1304 = vst [vmem:[#allocation11 + $0x6c] sm:$0xf] %v1240
    %1305 = vst [vmem:[#allocation11 + $0x70] sm:$0xf] %v1241
    %1306 = vst [vmem:[#allocation11 + $0x74] sm:$0xf] %v1242
    %1307 = vst [vmem:[#allocation11 + $0x78] sm:$0xf] %v1243
    %1308 = vst [vmem:[#allocation11 + $0x7c] sm:$0xf] %v1244
    %1309 = vxpose.xlu0.b32.start [1/16] %v1117, 128
    %1310 = vxpose.xlu0.b32.cont [2/16] %v1118, 128
    %1311 = vxpose.xlu0.b32.cont [3/16] %v1119, 128
    %1312 = vxpose.xlu0.b32.cont [4/16] %v1120, 128
    %1313 = vxpose.xlu0.b32.cont [5/16] %v1121, 128
    %1314 = vxpose.xlu0.b32.cont [6/16] %v1122, 128
    %1315 = vxpose.xlu0.b32.cont [7/16] %v1123, 128
    %1316 = vxpose.xlu0.b32.cont [8/16] %v1124, 128
    %1317 = vxpose.xlu0.b32.cont [9/16] %v1125, 128
    %1318 = vxpose.xlu0.b32.cont [10/16] %v1126, 128
    %1319 = vxpose.xlu0.b32.cont [11/16] %v1127, 128
    %1320 = vxpose.xlu0.b32.cont [12/16] %v1128, 128
    %1321 = vxpose.xlu0.b32.cont [13/16] %v1129, 128
    %1322 = vxpose.xlu0.b32.cont [14/16] %v1130, 128
    %1323 = vxpose.xlu0.b32.cont [15/16] %v1131, 128
    %1324 = vxpose.xlu0.b32.end [16/16] %v1132, 128
    %v1325 = vpop.trf.xlu0
    %v1326 = vpop.trf.xlu0
    %v1327 = vpop.trf.xlu0
    %v1328 = vpop.trf.xlu0
    %v1329 = vpop.trf.xlu0
    %v1330 = vpop.trf.xlu0
    %v1331 = vpop.trf.xlu0
    %v1332 = vpop.trf.xlu0
    %v1333 = vpop.trf.xlu0
    %v1334 = vpop.trf.xlu0
    %v1335 = vpop.trf.xlu0
    %v1336 = vpop.trf.xlu0
    %v1337 = vpop.trf.xlu0
    %v1338 = vpop.trf.xlu0
    %v1339 = vpop.trf.xlu0
    %v1340 = vpop.trf.xlu0
    %1341 = vxpose.xlu0.b32.start [1/16] %v1133, 128
    %1342 = vxpose.xlu0.b32.cont [2/16] %v1134, 128
    %1343 = vxpose.xlu0.b32.cont [3/16] %v1135, 128
    %1344 = vxpose.xlu0.b32.cont [4/16] %v1136, 128
    %1345 = vxpose.xlu0.b32.cont [5/16] %v1137, 128
    %1346 = vxpose.xlu0.b32.cont [6/16] %v1138, 128
    %1347 = vxpose.xlu0.b32.cont [7/16] %v1139, 128
    %1348 = vxpose.xlu0.b32.cont [8/16] %v1140, 128
    %1349 = vxpose.xlu0.b32.cont [9/16] %v1141, 128
    %1350 = vxpose.xlu0.b32.cont [10/16] %v1142, 128
    %1351 = vxpose.xlu0.b32.cont [11/16] %v1143, 128
    %1352 = vxpose.xlu0.b32.cont [12/16] %v1144, 128
    %1353 = vxpose.xlu0.b32.cont [13/16] %v1145, 128
    %1354 = vxpose.xlu0.b32.cont [14/16] %v1146, 128
    %1355 = vxpose.xlu0.b32.cont [15/16] %v1147, 128
    %1356 = vxpose.xlu0.b32.end [16/16] %v1148, 128
    %v1357 = vpop.trf.xlu0
    %v1358 = vpop.trf.xlu0
    %v1359 = vpop.trf.xlu0
    %v1360 = vpop.trf.xlu0
    %v1361 = vpop.trf.xlu0
    %v1362 = vpop.trf.xlu0
    %v1363 = vpop.trf.xlu0
    %v1364 = vpop.trf.xlu0
    %v1365 = vpop.trf.xlu0
    %v1366 = vpop.trf.xlu0
    %v1367 = vpop.trf.xlu0
    %v1368 = vpop.trf.xlu0
    %v1369 = vpop.trf.xlu0
    %v1370 = vpop.trf.xlu0
    %v1371 = vpop.trf.xlu0
    %v1372 = vpop.trf.xlu0
    %1373 = vmatprep.subr.mxu0 0.0
    %1374 = vmatpush1.msra.mxu0 %v60
    %1375 = vmatprep.subr.mxu0 0.0
    %1376 = vmatpush1.msra.mxu0 %v61
    %1377 = vmatprep.subr.mxu0 0.0
    %1378 = vmatpush1.msra.mxu0 %v62
    %1379 = vmatprep.subr.mxu0 0.0
    %1380 = vmatpush1.msra.mxu0 %v63
    %1381 = vmatprep.subr.mxu0 0.0
    %1382 = vmatpush1.msra.mxu0 %v64
    %1383 = vmatprep.subr.mxu0 0.0
    %1384 = vmatpush1.msra.mxu0 %v65
    %1385 = vmatprep.subr.mxu0 0.0
    %1386 = vmatpush1.msra.mxu0 %v66
    %1387 = vmatprep.subr.mxu0 0.0
    %1388 = vmatpush1.msra.mxu0 %v67
    %1389 = vmatprep.subr.mxu0 0.0
    %1390 = vmatpush1.msra.mxu0 %v68
    %1391 = vmatprep.subr.mxu0 0.0
    %1392 = vmatpush1.msra.mxu0 %v69
    %1393 = vmatprep.subr.mxu0 0.0
    %1394 = vmatpush1.msra.mxu0 %v70
    %1395 = vmatprep.subr.mxu0 0.0
    %1396 = vmatpush1.msra.mxu0 %v71
    %1397 = vmatprep.subr.mxu0 0.0
    %1398 = vmatpush1.msra.mxu0 %v72
    %1399 = vmatprep.subr.mxu0 0.0
    %1400 = vmatpush1.msra.mxu0 %v73
    %1401 = vmatprep.subr.mxu0 0.0
    %1402 = vmatpush1.msra.mxu0 %v74
    %1403 = vmatprep.subr.mxu0 0.0
    %1404 = vmatpush1.msra.mxu0 %v75
    %1405 = vmatprep.subr.mxu0 0.0
    %1406 = vmatpush1.msra.mxu0 %v76
    %1407 = vmatprep.subr.mxu0 0.0
    %1408 = vmatpush1.msra.mxu0 %v77
    %1409 = vmatprep.subr.mxu0 0.0
    %1410 = vmatpush1.msra.mxu0 %v78
    %1411 = vmatprep.subr.mxu0 0.0
    %1412 = vmatpush1.msra.mxu0 %v79
    %1413 = vmatprep.subr.mxu0 0.0
    %1414 = vmatpush1.msra.mxu0 %v80
    %1415 = vmatprep.subr.mxu0 0.0
    %1416 = vmatpush1.msra.mxu0 %v81
    %1417 = vmatprep.subr.mxu0 0.0
    %1418 = vmatpush1.msra.mxu0 %v82
    %1419 = vmatprep.subr.mxu0 0.0
    %1420 = vmatpush1.msra.mxu0 %v83
    %1421 = vmatprep.subr.mxu0 0.0
    %1422 = vmatpush1.msra.mxu0 %v84
    %1423 = vmatprep.subr.mxu0 0.0
    %1424 = vmatpush1.msra.mxu0 %v85
    %1425 = vmatprep.subr.mxu0 0.0
    %1426 = vmatpush1.msra.mxu0 %v86
    %1427 = vmatprep.subr.mxu0 0.0
    %1428 = vmatpush1.msra.mxu0 %v87
    %1429 = vmatprep.subr.mxu0 0.0
    %1430 = vmatpush1.msra.mxu0 %v88
    %1431 = vmatprep.subr.mxu0 0.0
    %1432 = vmatpush1.msra.mxu0 %v89
    %1433 = vmatprep.subr.mxu0 0.0
    %1434 = vmatpush1.msra.mxu0 %v90
    %1435 = vmatprep.subr.mxu0 0.0
    %1436 = vmatpush1.msra.mxu0 %v91
    %1437 = vmatprep.mubr.f32.mxu0 %v1357
    %1438 = vmatmul.mubr.f32.gmra.mrb[0].mxu0 %v1325
    %v1439 = vpop.f32.mrb[0].mxu0
    %v1440 = vadd.f32 0.0, %v1439
    %v1441 = vpop.f32.mrb[0].mxu0
    %1442 = vmatprep.mubr.f32.mxu0 %v1358
    %1443 = vmatmul.mubr.f32.gmra.mrb[0].mxu0 %v1326
    %v1444 = vpop.f32.mrb[0].mxu0
    %v1445 = vadd.f32 0.0, %v1444
    %v1446 = vpop.f32.mrb[0].mxu0
    %1447 = vmatprep.mubr.f32.mxu0 %v1359
    %1448 = vmatmul.mubr.f32.gmra.mrb[0].mxu0 %v1327
    %v1449 = vpop.f32.mrb[0].mxu0
    %v1450 = vadd.f32 0.0, %v1449
    %v1451 = vpop.f32.mrb[0].mxu0
    %1452 = vmatprep.mubr.f32.mxu0 %v1360
    %1453 = vmatmul.mubr.f32.gmra.mrb[0].mxu0 %v1328
    %v1454 = vpop.f32.mrb[0].mxu0
    %v1455 = vadd.f32 0.0, %v1454
    %v1456 = vpop.f32.mrb[0].mxu0
    %1457 = vmatprep.mubr.f32.mxu0 %v1361
    %1458 = vmatmul.mubr.f32.gmra.mrb[0].mxu0 %v1329
    %v1459 = vpop.f32.mrb[0].mxu0
    %v1460 = vadd.f32 0.0, %v1459
    %v1461 = vpop.f32.mrb[0].mxu0
    %1462 = vmatprep.mubr.f32.mxu0 %v1362
    %1463 = vmatmul.mubr.f32.gmra.mrb[0].mxu0 %v1330
    %v1464 = vpop.f32.mrb[0].mxu0
    %v1465 = vadd.f32 0.0, %v1464
    %v1466 = vpop.f32.mrb[0].mxu0
    %1467 = vmatprep.mubr.f32.mxu0 %v1363
    %1468 = vmatmul.mubr.f32.gmra.mrb[0].mxu0 %v1331
    %v1469 = vpop.f32.mrb[0].mxu0
    %v1470 = vadd.f32 0.0, %v1469
    %v1471 = vpop.f32.mrb[0].mxu0
    %1472 = vmatprep.mubr.f32.mxu0 %v1364
    %1473 = vmatmul.mubr.f32.gmra.mrb[0].mxu0 %v1332
    %v1474 = vpop.f32.mrb[0].mxu0
    %v1475 = vadd.f32 0.0, %v1474
    %v1476 = vpop.f32.mrb[0].mxu0
    %1477 = vmatprep.mubr.f32.mxu0 %v1365
    %1478 = vmatmul.mubr.f32.gmra.mrb[0].mxu0 %v1333
    %v1479 = vpop.f32.mrb[0].mxu0
    %v1480 = vadd.f32 0.0, %v1479
    %v1481 = vpop.f32.mrb[0].mxu0
    %1482 = vmatprep.mubr.f32.mxu0 %v1366
    %1483 = vmatmul.mubr.f32.gmra.mrb[0].mxu0 %v1334
    %v1484 = vpop.f32.mrb[0].mxu0
    %v1485 = vadd.f32 0.0, %v1484
    %v1486 = vpop.f32.mrb[0].mxu0
    %1487 = vmatprep.mubr.f32.mxu0 %v1367
    %1488 = vmatmul.mubr.f32.gmra.mrb[0].mxu0 %v1335
    %v1489 = vpop.f32.mrb[0].mxu0
    %v1490 = vadd.f32 0.0, %v1489
    %v1491 = vpop.f32.mrb[0].mxu0
    %1492 = vmatprep.mubr.f32.mxu0 %v1368
    %1493 = vmatmul.mubr.f32.gmra.mrb[0].mxu0 %v1336
    %v1494 = vpop.f32.mrb[0].mxu0
    %v1495 = vadd.f32 0.0, %v1494
    %v1496 = vpop.f32.mrb[0].mxu0
    %1497 = vmatprep.mubr.f32.mxu0 %v1369
    %1498 = vmatmul.mubr.f32.gmra.mrb[0].mxu0 %v1337
    %v1499 = vpop.f32.mrb[0].mxu0
    %v1500 = vadd.f32 0.0, %v1499
    %v1501 = vpop.f32.mrb[0].mxu0
    %1502 = vmatprep.mubr.f32.mxu0 %v1370
    %1503 = vmatmul.mubr.f32.gmra.mrb[0].mxu0 %v1338
    %v1504 = vpop.f32.mrb[0].mxu0
    %v1505 = vadd.f32 0.0, %v1504
    %v1506 = vpop.f32.mrb[0].mxu0
    %1507 = vmatprep.mubr.f32.mxu0 %v1371
    %1508 = vmatmul.mubr.f32.gmra.mrb[0].mxu0 %v1339
    %v1509 = vpop.f32.mrb[0].mxu0
    %v1510 = vadd.f32 0.0, %v1509
    %v1511 = vpop.f32.mrb[0].mxu0
    %1512 = vmatprep.mubr.f32.mxu0 %v1372
    %1513 = vmatmul.mubr.f32.gmra.mrb[0].mxu0 %v1340
    %v1514 = vpop.f32.mrb[0].mxu0
    %v1515 = vadd.f32 0.0, %v1514
    %v1516 = vpop.f32.mrb[0].mxu0
    %1517 = vdwg.mxu0
    %vm1518 = vcmp.gt.f32.partialorder %v1440, 0.0
    %vm1519 = vcmp.gt.f32.partialorder %v1445, 0.0
    %vm1520 = vcmp.gt.f32.partialorder %v1450, 0.0
    %vm1521 = vcmp.gt.f32.partialorder %v1455, 0.0
    %vm1522 = vcmp.gt.f32.partialorder %v1460, 0.0
    %vm1523 = vcmp.gt.f32.partialorder %v1465, 0.0
    %vm1524 = vcmp.gt.f32.partialorder %v1470, 0.0
    %vm1525 = vcmp.gt.f32.partialorder %v1475, 0.0
    %vm1526 = vcmp.gt.f32.partialorder %v1480, 0.0
    %vm1527 = vcmp.gt.f32.partialorder %v1485, 0.0
    %vm1528 = vcmp.gt.f32.partialorder %v1490, 0.0
    %vm1529 = vcmp.gt.f32.partialorder %v1495, 0.0
    %vm1530 = vcmp.gt.f32.partialorder %v1500, 0.0
    %vm1531 = vcmp.gt.f32.partialorder %v1505, 0.0
    %vm1532 = vcmp.gt.f32.partialorder %v1510, 0.0
    %vm1533 = vcmp.gt.f32.partialorder %v1515, 0.0
    %v1534 = vmul.f32 %v1440, 1.442695
    %v1535 = vpow.pop %v1534
    %v1536 = vmul.f32 %v1445, 1.442695
    %v1537 = vpow.pop %v1536
    %v1538 = vmul.f32 %v1450, 1.442695
    %v1539 = vpow.pop %v1538
    %v1540 = vmul.f32 %v1455, 1.442695
    %v1541 = vpow.pop %v1540
    %v1542 = vmul.f32 %v1460, 1.442695
    %v1543 = vpow.pop %v1542
    %v1544 = vmul.f32 %v1465, 1.442695
    %v1545 = vpow.pop %v1544
    %v1546 = vmul.f32 %v1470, 1.442695
    %v1547 = vpow.pop %v1546
    %v1548 = vmul.f32 %v1475, 1.442695
    %v1549 = vpow.pop %v1548
    %v1550 = vmul.f32 %v1480, 1.442695
    %v1551 = vpow.pop %v1550
    %v1552 = vmul.f32 %v1485, 1.442695
    %v1553 = vpow.pop %v1552
    %v1554 = vmul.f32 %v1490, 1.442695
    %v1555 = vpow.pop %v1554
    %v1556 = vmul.f32 %v1495, 1.442695
    %v1557 = vpow.pop %v1556
    %v1558 = vmul.f32 %v1500, 1.442695
    %v1559 = vpow.pop %v1558
    %v1560 = vmul.f32 %v1505, 1.442695
    %v1561 = vpow.pop %v1560
    %v1562 = vmul.f32 %v1510, 1.442695
    %v1563 = vpow.pop %v1562
    %v1564 = vmul.f32 %v1515, 1.442695
    %v1565 = vpow.pop %v1564
    %v1566 = vsub.f32 %v1535, 1.0
    %v1567 = vsub.f32 %v1537, 1.0
    %v1568 = vsub.f32 %v1539, 1.0
    %v1569 = vsub.f32 %v1541, 1.0
    %v1570 = vsub.f32 %v1543, 1.0
    %v1571 = vsub.f32 %v1545, 1.0
    %v1572 = vsub.f32 %v1547, 1.0
    %v1573 = vsub.f32 %v1549, 1.0
    %v1574 = vsub.f32 %v1551, 1.0
    %v1575 = vsub.f32 %v1553, 1.0
    %v1576 = vsub.f32 %v1555, 1.0
    %v1577 = vsub.f32 %v1557, 1.0
    %v1578 = vsub.f32 %v1559, 1.0
    %v1579 = vsub.f32 %v1561, 1.0
    %v1580 = vsub.f32 %v1563, 1.0
    %v1581 = vsub.f32 %v1565, 1.0
    %v1582 = vmul.f32 %v1566, 1.6732632
    %v1583 = vmul.f32 %v1567, 1.6732632
    %v1584 = vmul.f32 %v1568, 1.6732632
    %v1585 = vmul.f32 %v1569, 1.6732632
    %v1586 = vmul.f32 %v1570, 1.6732632
    %v1587 = vmul.f32 %v1571, 1.6732632
    %v1588 = vmul.f32 %v1572, 1.6732632
    %v1589 = vmul.f32 %v1573, 1.6732632
    %v1590 = vmul.f32 %v1574, 1.6732632
    %v1591 = vmul.f32 %v1575, 1.6732632
    %v1592 = vmul.f32 %v1576, 1.6732632
    %v1593 = vmul.f32 %v1577, 1.6732632
    %v1594 = vmul.f32 %v1578, 1.6732632
    %v1595 = vmul.f32 %v1579, 1.6732632
    %v1596 = vmul.f32 %v1580, 1.6732632
    %v1597 = vmul.f32 %v1581, 1.6732632
    %v1598 = vsel %vm1518, %v1440, %v1582
    %v1599 = vsel %vm1519, %v1445, %v1583
    %v1600 = vsel %vm1520, %v1450, %v1584
    %v1601 = vsel %vm1521, %v1455, %v1585
    %v1602 = vsel %vm1522, %v1460, %v1586
    %v1603 = vsel %vm1523, %v1465, %v1587
    %v1604 = vsel %vm1524, %v1470, %v1588
    %v1605 = vsel %vm1525, %v1475, %v1589
    %v1606 = vsel %vm1526, %v1480, %v1590
    %v1607 = vsel %vm1527, %v1485, %v1591
    %v1608 = vsel %vm1528, %v1490, %v1592
    %v1609 = vsel %vm1529, %v1495, %v1593
    %v1610 = vsel %vm1530, %v1500, %v1594
    %v1611 = vsel %vm1531, %v1505, %v1595
    %v1612 = vsel %vm1532, %v1510, %v1596
    %v1613 = vsel %vm1533, %v1515, %v1597
    %v1614 = vmul.f32 %v1598, 1.050701
    %v1615 = vmul.f32 %v1599, 1.050701
    %v1616 = vmul.f32 %v1600, 1.050701
    %v1617 = vmul.f32 %v1601, 1.050701
    %v1618 = vmul.f32 %v1602, 1.050701
    %v1619 = vmul.f32 %v1603, 1.050701
    %v1620 = vmul.f32 %v1604, 1.050701
    %v1621 = vmul.f32 %v1605, 1.050701
    %v1622 = vmul.f32 %v1606, 1.050701
    %v1623 = vmul.f32 %v1607, 1.050701
    %v1624 = vmul.f32 %v1608, 1.050701
    %v1625 = vmul.f32 %v1609, 1.050701
    %v1626 = vmul.f32 %v1610, 1.050701
    %v1627 = vmul.f32 %v1611, 1.050701
    %v1628 = vmul.f32 %v1612, 1.050701
    %v1629 = vmul.f32 %v1613, 1.050701
    %1630 = vst [vmem:[#allocation13] sm:$0xff] %v1614
    %1631 = vst [vmem:[#allocation13 + $0x8] sm:$0xff] %v1615
    %1632 = vst [vmem:[#allocation13 + $0x10] sm:$0xff] %v1616
    %1633 = vst [vmem:[#allocation13 + $0x18] sm:$0xff] %v1617
    %1634 = vst [vmem:[#allocation13 + $0x20] sm:$0xff] %v1618
    %1635 = vst [vmem:[#allocation13 + $0x28] sm:$0xff] %v1619
    %1636 = vst [vmem:[#allocation13 + $0x30] sm:$0xff] %v1620
    %1637 = vst [vmem:[#allocation13 + $0x38] sm:$0xff] %v1621
    %1638 = vst [vmem:[#allocation13 + $0x40] sm:$0xff] %v1622
    %1639 = vst [vmem:[#allocation13 + $0x48] sm:$0xff] %v1623
    %1640 = vst [vmem:[#allocation13 + $0x50] sm:$0xff] %v1624
    %1641 = vst [vmem:[#allocation13 + $0x58] sm:$0xff] %v1625
    %1642 = vst [vmem:[#allocation13 + $0x60] sm:$0xff] %v1626
    %1643 = vst [vmem:[#allocation13 + $0x68] sm:$0xff] %v1627
    %1644 = vst [vmem:[#allocation13 + $0x70] sm:$0xff] %v1628
    %1645 = vst [vmem:[#allocation13 + $0x78] sm:$0xff] %v1629
    %1646 = vxpose.xlu0.b32.start [1/16] %v628, 128
    %1647 = vxpose.xlu0.b32.cont [2/16] %v629, 128
    %1648 = vxpose.xlu0.b32.cont [3/16] %v630, 128
    %1649 = vxpose.xlu0.b32.cont [4/16] %v631, 128
    %1650 = vxpose.xlu0.b32.cont [5/16] %v632, 128
    %1651 = vxpose.xlu0.b32.cont [6/16] %v633, 128
    %1652 = vxpose.xlu0.b32.cont [7/16] %v634, 128
    %1653 = vxpose.xlu0.b32.cont [8/16] %v635, 128
    %1654 = vxpose.xlu0.b32.cont [9/16] %v636, 128
    %1655 = vxpose.xlu0.b32.cont [10/16] %v637, 128
    %1656 = vxpose.xlu0.b32.cont [11/16] %v638, 128
    %1657 = vxpose.xlu0.b32.cont [12/16] %v639, 128
    %1658 = vxpose.xlu0.b32.cont [13/16] %v640, 128
    %1659 = vxpose.xlu0.b32.cont [14/16] %v641, 128
    %1660 = vxpose.xlu0.b32.cont [15/16] %v642, 128
    %1661 = vxpose.xlu0.b32.end [16/16] %v643, 128
    %v1662 = vpop.trf.xlu0
    %v1663 = vpop.trf.xlu0
    %v1664 = vpop.trf.xlu0
    %v1665 = vpop.trf.xlu0
    %v1666 = vpop.trf.xlu0
    %v1667 = vpop.trf.xlu0
    %v1668 = vpop.trf.xlu0
    %v1669 = vpop.trf.xlu0
    %v1670 = vpop.trf.xlu0
    %v1671 = vpop.trf.xlu0
    %v1672 = vpop.trf.xlu0
    %v1673 = vpop.trf.xlu0
    %v1674 = vpop.trf.xlu0
    %v1675 = vpop.trf.xlu0
    %v1676 = vpop.trf.xlu0
    %v1677 = vpop.trf.xlu0
    %1678 = vxpose.xlu0.b32.start [1/16] %v644, 128
    %1679 = vxpose.xlu0.b32.cont [2/16] %v645, 128
    %1680 = vxpose.xlu0.b32.cont [3/16] %v646, 128
    %1681 = vxpose.xlu0.b32.cont [4/16] %v647, 128
    %1682 = vxpose.xlu0.b32.cont [5/16] %v648, 128
    %1683 = vxpose.xlu0.b32.cont [6/16] %v649, 128
    %1684 = vxpose.xlu0.b32.cont [7/16] %v650, 128
    %1685 = vxpose.xlu0.b32.cont [8/16] %v651, 128
    %1686 = vxpose.xlu0.b32.cont [9/16] %v652, 128
    %1687 = vxpose.xlu0.b32.cont [10/16] %v653, 128
    %1688 = vxpose.xlu0.b32.cont [11/16] %v654, 128
    %1689 = vxpose.xlu0.b32.cont [12/16] %v655, 128
    %1690 = vxpose.xlu0.b32.cont [13/16] %v656, 128
    %1691 = vxpose.xlu0.b32.cont [14/16] %v657, 128
    %1692 = vxpose.xlu0.b32.cont [15/16] %v658, 128
    %1693 = vxpose.xlu0.b32.end [16/16] %v659, 128
    %v1694 = vpop.trf.xlu0
    %v1695 = vpop.trf.xlu0
    %v1696 = vpop.trf.xlu0
    %v1697 = vpop.trf.xlu0
    %v1698 = vpop.trf.xlu0
    %v1699 = vpop.trf.xlu0
    %v1700 = vpop.trf.xlu0
    %v1701 = vpop.trf.xlu0
    %v1702 = vpop.trf.xlu0
    %v1703 = vpop.trf.xlu0
    %v1704 = vpop.trf.xlu0
    %v1705 = vpop.trf.xlu0
    %v1706 = vpop.trf.xlu0
    %v1707 = vpop.trf.xlu0
    %v1708 = vpop.trf.xlu0
    %v1709 = vpop.trf.xlu0
    %1710 = vmatprep.subr.mxu0 0.0
    %1711 = vmatpush1.msra.mxu0 %v628
    %1712 = vmatprep.subr.mxu0 0.0
    %1713 = vmatpush1.msra.mxu0 %v629
    %1714 = vmatprep.subr.mxu0 0.0
    %1715 = vmatpush1.msra.mxu0 %v630
    %1716 = vmatprep.subr.mxu0 0.0
    %1717 = vmatpush1.msra.mxu0 %v631
    %1718 = vmatprep.subr.mxu0 0.0
    %1719 = vmatpush1.msra.mxu0 %v632
    %1720 = vmatprep.subr.mxu0 0.0
    %1721 = vmatpush1.msra.mxu0 %v633
    %1722 = vmatprep.subr.mxu0 0.0
    %1723 = vmatpush1.msra.mxu0 %v634
    %1724 = vmatprep.subr.mxu0 0.0
    %1725 = vmatpush1.msra.mxu0 %v635
    %1726 = vmatprep.subr.mxu0 0.0
    %1727 = vmatpush1.msra.mxu0 %v636
    %1728 = vmatprep.subr.mxu0 0.0
    %1729 = vmatpush1.msra.mxu0 %v637
    %1730 = vmatprep.subr.mxu0 0.0
    %1731 = vmatpush1.msra.mxu0 %v638
    %1732 = vmatprep.subr.mxu0 0.0
    %1733 = vmatpush1.msra.mxu0 %v639
    %1734 = vmatprep.subr.mxu0 0.0
    %1735 = vmatpush1.msra.mxu0 %v640
    %1736 = vmatprep.subr.mxu0 0.0
    %1737 = vmatpush1.msra.mxu0 %v641
    %1738 = vmatprep.subr.mxu0 0.0
    %1739 = vmatpush1.msra.mxu0 %v642
    %1740 = vmatprep.subr.mxu0 0.0
    %1741 = vmatpush1.msra.mxu0 %v643
    %1742 = vmatprep.subr.mxu0 0.0
    %1743 = vmatpush1.msra.mxu0 %v644
    %1744 = vmatprep.subr.mxu0 0.0
    %1745 = vmatpush1.msra.mxu0 %v645
    %1746 = vmatprep.subr.mxu0 0.0
    %1747 = vmatpush1.msra.mxu0 %v646
    %1748 = vmatprep.subr.mxu0 0.0
    %1749 = vmatpush1.msra.mxu0 %v647
    %1750 = vmatprep.subr.mxu0 0.0
    %1751 = vmatpush1.msra.mxu0 %v648
    %1752 = vmatprep.subr.mxu0 0.0
    %1753 = vmatpush1.msra.mxu0 %v649
    %1754 = vmatprep.subr.mxu0 0.0
    %1755 = vmatpush1.msra.mxu0 %v650
    %1756 = vmatprep.subr.mxu0 0.0
    %1757 = vmatpush1.msra.mxu0 %v651
    %1758 = vmatprep.subr.mxu0 0.0
    %1759 = vmatpush1.msra.mxu0 %v652
    %1760 = vmatprep.subr.mxu0 0.0
    %1761 = vmatpush1.msra.mxu0 %v653
    %1762 = vmatprep.subr.mxu0 0.0
    %1763 = vmatpush1.msra.mxu0 %v654
    %1764 = vmatprep.subr.mxu0 0.0
    %1765 = vmatpush1.msra.mxu0 %v655
    %1766 = vmatprep.subr.mxu0 0.0
    %1767 = vmatpush1.msra.mxu0 %v656
    %1768 = vmatprep.subr.mxu0 0.0
    %1769 = vmatpush1.msra.mxu0 %v657
    %1770 = vmatprep.subr.mxu0 0.0
    %1771 = vmatpush1.msra.mxu0 %v658
    %1772 = vmatprep.subr.mxu0 0.0
    %1773 = vmatpush1.msra.mxu0 %v659
    %1774 = vmatprep.mubr.f32.mxu0 %v1694
    %1775 = vmatmul.mubr.f32.gmra.mrb[0].mxu0 %v1662
    %v1776 = vpop.f32.mrb[0].mxu0
    %v1777 = vadd.f32 0.0, %v1776
    %v1778 = vpop.f32.mrb[0].mxu0
    %1779 = vmatprep.mubr.f32.mxu0 %v1695
    %1780 = vmatmul.mubr.f32.gmra.mrb[0].mxu0 %v1663
    %v1781 = vpop.f32.mrb[0].mxu0
    %v1782 = vadd.f32 0.0, %v1781
    %v1783 = vpop.f32.mrb[0].mxu0
    %1784 = vmatprep.mubr.f32.mxu0 %v1696
    %1785 = vmatmul.mubr.f32.gmra.mrb[0].mxu0 %v1664
    %v1786 = vpop.f32.mrb[0].mxu0
    %v1787 = vadd.f32 0.0, %v1786
    %v1788 = vpop.f32.mrb[0].mxu0
    %1789 = vmatprep.mubr.f32.mxu0 %v1697
    %1790 = vmatmul.mubr.f32.gmra.mrb[0].mxu0 %v1665
    %v1791 = vpop.f32.mrb[0].mxu0
    %v1792 = vadd.f32 0.0, %v1791
    %v1793 = vpop.f32.mrb[0].mxu0
    %1794 = vmatprep.mubr.f32.mxu0 %v1698
    %1795 = vmatmul.mubr.f32.gmra.mrb[0].mxu0 %v1666
    %v1796 = vpop.f32.mrb[0].mxu0
    %v1797 = vadd.f32 0.0, %v1796
    %v1798 = vpop.f32.mrb[0].mxu0
    %1799 = vmatprep.mubr.f32.mxu0 %v1699
    %1800 = vmatmul.mubr.f32.gmra.mrb[0].mxu0 %v1667
    %v1801 = vpop.f32.mrb[0].mxu0
    %v1802 = vadd.f32 0.0, %v1801
    %v1803 = vpop.f32.mrb[0].mxu0
    %1804 = vmatprep.mubr.f32.mxu0 %v1700
    %1805 = vmatmul.mubr.f32.gmra.mrb[0].mxu0 %v1668
    %v1806 = vpop.f32.mrb[0].mxu0
    %v1807 = vadd.f32 0.0, %v1806
    %v1808 = vpop.f32.mrb[0].mxu0
    %1809 = vmatprep.mubr.f32.mxu0 %v1701
    %1810 = vmatmul.mubr.f32.gmra.mrb[0].mxu0 %v1669
    %v1811 = vpop.f32.mrb[0].mxu0
    %v1812 = vadd.f32 0.0, %v1811
    %v1813 = vpop.f32.mrb[0].mxu0
    %1814 = vmatprep.mubr.f32.mxu0 %v1702
    %1815 = vmatmul.mubr.f32.gmra.mrb[0].mxu0 %v1670
    %v1816 = vpop.f32.mrb[0].mxu0
    %v1817 = vadd.f32 0.0, %v1816
    %v1818 = vpop.f32.mrb[0].mxu0
    %1819 = vmatprep.mubr.f32.mxu0 %v1703
    %1820 = vmatmul.mubr.f32.gmra.mrb[0].mxu0 %v1671
    %v1821 = vpop.f32.mrb[0].mxu0
    %v1822 = vadd.f32 0.0, %v1821
    %v1823 = vpop.f32.mrb[0].mxu0
    %1824 = vmatprep.mubr.f32.mxu0 %v1704
    %1825 = vmatmul.mubr.f32.gmra.mrb[0].mxu0 %v1672
    %v1826 = vpop.f32.mrb[0].mxu0
    %v1827 = vadd.f32 0.0, %v1826
    %v1828 = vpop.f32.mrb[0].mxu0
    %1829 = vmatprep.mubr.f32.mxu0 %v1705
    %1830 = vmatmul.mubr.f32.gmra.mrb[0].mxu0 %v1673
    %v1831 = vpop.f32.mrb[0].mxu0
    %v1832 = vadd.f32 0.0, %v1831
    %v1833 = vpop.f32.mrb[0].mxu0
    %1834 = vmatprep.mubr.f32.mxu0 %v1706
    %1835 = vmatmul.mubr.f32.gmra.mrb[0].mxu0 %v1674
    %v1836 = vpop.f32.mrb[0].mxu0
    %v1837 = vadd.f32 0.0, %v1836
    %v1838 = vpop.f32.mrb[0].mxu0
    %1839 = vmatprep.mubr.f32.mxu0 %v1707
    %1840 = vmatmul.mubr.f32.gmra.mrb[0].mxu0 %v1675
    %v1841 = vpop.f32.mrb[0].mxu0
    %v1842 = vadd.f32 0.0, %v1841
    %v1843 = vpop.f32.mrb[0].mxu0
    %1844 = vmatprep.mubr.f32.mxu0 %v1708
    %1845 = vmatmul.mubr.f32.gmra.mrb[0].mxu0 %v1676
    %v1846 = vpop.f32.mrb[0].mxu0
    %v1847 = vadd.f32 0.0, %v1846
    %v1848 = vpop.f32.mrb[0].mxu0
    %1849 = vmatprep.mubr.f32.mxu0 %v1709
    %1850 = vmatmul.mubr.f32.gmra.mrb[0].mxu0 %v1677
    %v1851 = vpop.f32.mrb[0].mxu0
    %v1852 = vadd.f32 0.0, %v1851
    %v1853 = vpop.f32.mrb[0].mxu0
    %1854 = vdwg.mxu0
    %v1855 = vlaneseq
    %v1856 = vshrl.u32 %v1855, 7
    %v1857 = vadd.s32 %v1856, 8
    %v1858 = vadd.s32 %v1856, 16
    %v1859 = vadd.s32 %v1856, 24
    %v1860 = vadd.s32 %v1856, 32
    %v1861 = vadd.s32 %v1856, 40
    %v1862 = vadd.s32 %v1856, 48
    %v1863 = vadd.s32 %v1856, 56
    %v1864 = vadd.s32 %v1856, 64
    %v1865 = vadd.s32 %v1856, 72
    %v1866 = vadd.s32 %v1856, 80
    %v1867 = vadd.s32 %v1856, 88
    %v1868 = vadd.s32 %v1856, 96
    %v1869 = vadd.s32 %v1856, 104
    %v1870 = vadd.s32 %v1856, 112
    %v1871 = vadd.s32 %v1856, 120
    %vm1872 = vcmp.eq.s32.totalorder %v1856, %v53
    %vm1873 = vcmp.eq.s32.totalorder %v1857, %v53
    %vm1874 = vcmp.eq.s32.totalorder %v1858, %v53
    %vm1875 = vcmp.eq.s32.totalorder %v1859, %v53
    %vm1876 = vcmp.eq.s32.totalorder %v1860, %v53
    %vm1877 = vcmp.eq.s32.totalorder %v1861, %v53
    %vm1878 = vcmp.eq.s32.totalorder %v1862, %v53
    %vm1879 = vcmp.eq.s32.totalorder %v1863, %v53
    %vm1880 = vcmp.eq.s32.totalorder %v1864, %v53
    %vm1881 = vcmp.eq.s32.totalorder %v1865, %v53
    %vm1882 = vcmp.eq.s32.totalorder %v1866, %v53
    %vm1883 = vcmp.eq.s32.totalorder %v1867, %v53
    %vm1884 = vcmp.eq.s32.totalorder %v1868, %v53
    %vm1885 = vcmp.eq.s32.totalorder %v1869, %v53
    %vm1886 = vcmp.eq.s32.totalorder %v1870, %v53
    %vm1887 = vcmp.eq.s32.totalorder %v1871, %v53
    %vm1888 = vcmp.lt.s32.totalorder %v1856, 8
    %vm1889 = vcmp.lt.s32.totalorder %v1857, 8
    %vm1890 = vcmp.lt.s32.totalorder %v1858, 8
    %vm1891 = vcmp.lt.s32.totalorder %v1859, 8
    %vm1892 = vcmp.lt.s32.totalorder %v1860, 8
    %vm1893 = vcmp.lt.s32.totalorder %v1861, 8
    %vm1894 = vcmp.lt.s32.totalorder %v1862, 8
    %vm1895 = vcmp.lt.s32.totalorder %v1863, 8
    %vm1896 = vcmp.lt.s32.totalorder %v1864, 8
    %vm1897 = vcmp.lt.s32.totalorder %v1865, 8
    %vm1898 = vcmp.lt.s32.totalorder %v1866, 8
    %vm1899 = vcmp.lt.s32.totalorder %v1867, 8
    %vm1900 = vcmp.lt.s32.totalorder %v1868, 8
    %vm1901 = vcmp.lt.s32.totalorder %v1869, 8
    %vm1902 = vcmp.lt.s32.totalorder %v1870, 8
    %vm1903 = vcmp.lt.s32.totalorder %v1871, 8
    %vm1904 = vmand %vm1872, %vm1888
    %vm1905 = vmand %vm1873, %vm1889
    %vm1906 = vmand %vm1874, %vm1890
    %vm1907 = vmand %vm1875, %vm1891
    %vm1908 = vmand %vm1876, %vm1892
    %vm1909 = vmand %vm1877, %vm1893
    %vm1910 = vmand %vm1878, %vm1894
    %vm1911 = vmand %vm1879, %vm1895
    %vm1912 = vmand %vm1880, %vm1896
    %vm1913 = vmand %vm1881, %vm1897
    %vm1914 = vmand %vm1882, %vm1898
    %vm1915 = vmand %vm1883, %vm1899
    %vm1916 = vmand %vm1884, %vm1900
    %vm1917 = vmand %vm1885, %vm1901
    %vm1918 = vmand %vm1886, %vm1902
    %vm1919 = vmand %vm1887, %vm1903
    %v1920 = vsel %vm1904, 1, 0
    %v1921 = vsel %vm1905, 1, 0
    %v1922 = vsel %vm1906, 1, 0
    %v1923 = vsel %vm1907, 1, 0
    %v1924 = vsel %vm1908, 1, 0
    %v1925 = vsel %vm1909, 1, 0
    %v1926 = vsel %vm1910, 1, 0
    %v1927 = vsel %vm1911, 1, 0
    %v1928 = vsel %vm1912, 1, 0
    %v1929 = vsel %vm1913, 1, 0
    %v1930 = vsel %vm1914, 1, 0
    %v1931 = vsel %vm1915, 1, 0
    %v1932 = vsel %vm1916, 1, 0
    %v1933 = vsel %vm1917, 1, 0
    %v1934 = vsel %vm1918, 1, 0
    %v1935 = vsel %vm1919, 1, 0
    %v1936 = vcvt.s32.f32 %v1920
    %v1937 = vcvt.s32.f32 %v1921
    %v1938 = vcvt.s32.f32 %v1922
    %v1939 = vcvt.s32.f32 %v1923
    %v1940 = vcvt.s32.f32 %v1924
    %v1941 = vcvt.s32.f32 %v1925
    %v1942 = vcvt.s32.f32 %v1926
    %v1943 = vcvt.s32.f32 %v1927
    %v1944 = vcvt.s32.f32 %v1928
    %v1945 = vcvt.s32.f32 %v1929
    %v1946 = vcvt.s32.f32 %v1930
    %v1947 = vcvt.s32.f32 %v1931
    %v1948 = vcvt.s32.f32 %v1932
    %v1949 = vcvt.s32.f32 %v1933
    %v1950 = vcvt.s32.f32 %v1934
    %v1951 = vcvt.s32.f32 %v1935
    %v1952 = vmul.f32 %v1777, %v1777
    %v1953 = vmul.f32 %v1782, %v1782
    %v1954 = vmul.f32 %v1787, %v1787
    %v1955 = vmul.f32 %v1792, %v1792
    %v1956 = vmul.f32 %v1797, %v1797
    %v1957 = vmul.f32 %v1802, %v1802
    %v1958 = vmul.f32 %v1807, %v1807
    %v1959 = vmul.f32 %v1812, %v1812
    %v1960 = vmul.f32 %v1817, %v1817
    %v1961 = vmul.f32 %v1822, %v1822
    %v1962 = vmul.f32 %v1827, %v1827
    %v1963 = vmul.f32 %v1832, %v1832
    %v1964 = vmul.f32 %v1837, %v1837
    %v1965 = vmul.f32 %v1842, %v1842
    %v1966 = vmul.f32 %v1847, %v1847
    %v1967 = vmul.f32 %v1852, %v1852
    %v1968 = vadd.f32 %v1952, %v1953
    %v1969 = vadd.f32 %v1968, %v1954
    %v1970 = vadd.f32 %v1969, %v1955
    %v1971 = vadd.f32 %v1970, %v1956
    %v1972 = vadd.f32 %v1971, %v1957
    %v1973 = vadd.f32 %v1972, %v1958
    %v1974 = vadd.f32 %v1973, %v1959
    %v1975 = vadd.f32 %v1974, %v1960
    %v1976 = vadd.f32 %v1975, %v1961
    %v1977 = vadd.f32 %v1976, %v1962
    %v1978 = vadd.f32 %v1977, %v1963
    %v1979 = vadd.f32 %v1978, %v1964
    %v1980 = vadd.f32 %v1979, %v1965
    %v1981 = vadd.f32 %v1980, %v1966
    %v1982 = vadd.f32 %v1981, %v1967
    %1983 = vadd.xlane.f32.xlu0 %v1982
    %v1984 = vpop.xlane.xlu0 %1983
    %v1985 = vrot.slane %v1984, 4
    %v1986 = vadd.f32 %v1984, %v1985
    %v1987 = vrot.slane %v1986, 2
    %v1988 = vadd.f32 %v1986, %v1987
    %v1989 = vrot.slane %v1988, 1
    %v1990 = vadd.f32 %v1988, %v1989
    %s1991 = vtos %v1990
    %v1992 = vstv %s1991
    %v1993 = vrsqrt.pop %v1992
    %v1994 = vmul.f32 %v1992, %v1993
    %vm1995 = vcmp.eq.f32.partialorder %v1992, inf
    %v1996 = vsel %vm1995, %v1992, %v1994
    %vm1997 = vcmp.eq.f32.partialorder %v1992, 0.0
    %v1998 = vand.u32 %v1992, 2147483648
    %v1999 = vsel %vm1997, %v1998, %v1996
    %s2000 = vtos %v1999
    %v2001 = vstv %s2000
    %v2002 = vrcp.pop %v2001
    %v2003 = vmul.f32 %v1777, %v2002
    %v2004 = vmul.f32 %v1782, %v2002
    %v2005 = vmul.f32 %v1787, %v2002
    %v2006 = vmul.f32 %v1792, %v2002
    %v2007 = vmul.f32 %v1797, %v2002
    %v2008 = vmul.f32 %v1802, %v2002
    %v2009 = vmul.f32 %v1807, %v2002
    %v2010 = vmul.f32 %v1812, %v2002
    %v2011 = vmul.f32 %v1817, %v2002
    %v2012 = vmul.f32 %v1822, %v2002
    %v2013 = vmul.f32 %v1827, %v2002
    %v2014 = vmul.f32 %v1832, %v2002
    %v2015 = vmul.f32 %v1837, %v2002
    %v2016 = vmul.f32 %v1842, %v2002
    %v2017 = vmul.f32 %v1847, %v2002
    %v2018 = vmul.f32 %v1852, %v2002
    %v2019 = vrcp.pop 2.828427
    %v2020 = vmul.f32 %v1936, %v2019
    %v2021 = vmul.f32 %v1937, %v2019
    %v2022 = vmul.f32 %v1938, %v2019
    %v2023 = vmul.f32 %v1939, %v2019
    %v2024 = vmul.f32 %v1940, %v2019
    %v2025 = vmul.f32 %v1941, %v2019
    %v2026 = vmul.f32 %v1942, %v2019
    %v2027 = vmul.f32 %v1943, %v2019
    %v2028 = vmul.f32 %v1944, %v2019
    %v2029 = vmul.f32 %v1945, %v2019
    %v2030 = vmul.f32 %v1946, %v2019
    %v2031 = vmul.f32 %v1947, %v2019
    %v2032 = vmul.f32 %v1948, %v2019
    %v2033 = vmul.f32 %v1949, %v2019
    %v2034 = vmul.f32 %v1950, %v2019
    %v2035 = vmul.f32 %v1951, %v2019
    %v2036 = vsub.f32 %v2003, %v2020
    %v2037 = vsub.f32 %v2004, %v2021
    %v2038 = vsub.f32 %v2005, %v2022
    %v2039 = vsub.f32 %v2006, %v2023
    %v2040 = vsub.f32 %v2007, %v2024
    %v2041 = vsub.f32 %v2008, %v2025
    %v2042 = vsub.f32 %v2009, %v2026
    %v2043 = vsub.f32 %v2010, %v2027
    %v2044 = vsub.f32 %v2011, %v2028
    %v2045 = vsub.f32 %v2012, %v2029
    %v2046 = vsub.f32 %v2013, %v2030
    %v2047 = vsub.f32 %v2014, %v2031
    %v2048 = vsub.f32 %v2015, %v2032
    %v2049 = vsub.f32 %v2016, %v2033
    %v2050 = vsub.f32 %v2017, %v2034
    %v2051 = vsub.f32 %v2018, %v2035
    %v2052 = vmul.f32 %v2036, %v2036
    %v2053 = vmul.f32 %v2037, %v2037
    %v2054 = vmul.f32 %v2038, %v2038
    %v2055 = vmul.f32 %v2039, %v2039
    %v2056 = vmul.f32 %v2040, %v2040
    %v2057 = vmul.f32 %v2041, %v2041
    %v2058 = vmul.f32 %v2042, %v2042
    %v2059 = vmul.f32 %v2043, %v2043
    %v2060 = vmul.f32 %v2044, %v2044
    %v2061 = vmul.f32 %v2045, %v2045
    %v2062 = vmul.f32 %v2046, %v2046
    %v2063 = vmul.f32 %v2047, %v2047
    %v2064 = vmul.f32 %v2048, %v2048
    %v2065 = vmul.f32 %v2049, %v2049
    %v2066 = vmul.f32 %v2050, %v2050
    %v2067 = vmul.f32 %v2051, %v2051
    %v2068 = vadd.f32 %v2052, %v2053
    %v2069 = vadd.f32 %v2068, %v2054
    %v2070 = vadd.f32 %v2069, %v2055
    %v2071 = vadd.f32 %v2070, %v2056
    %v2072 = vadd.f32 %v2071, %v2057
    %v2073 = vadd.f32 %v2072, %v2058
    %v2074 = vadd.f32 %v2073, %v2059
    %v2075 = vadd.f32 %v2074, %v2060
    %v2076 = vadd.f32 %v2075, %v2061
    %v2077 = vadd.f32 %v2076, %v2062
    %v2078 = vadd.f32 %v2077, %v2063
    %v2079 = vadd.f32 %v2078, %v2064
    %v2080 = vadd.f32 %v2079, %v2065
    %v2081 = vadd.f32 %v2080, %v2066
    %v2082 = vadd.f32 %v2081, %v2067
    %2083 = vadd.xlane.f32.xlu0 %v2082
    %v2084 = vpop.xlane.xlu0 %2083
    %v2085 = vrot.slane %v2084, 4
    %v2086 = vadd.f32 %v2084, %v2085
    %v2087 = vrot.slane %v2086, 2
    %v2088 = vadd.f32 %v2086, %v2087
    %v2089 = vrot.slane %v2088, 1
    %v2090 = vadd.f32 %v2088, %v2089
    %s2091 = vtos %v2090
    %v2092 = vstv %s2091
    %v2093 = vrsqrt.pop %v2092
    %v2094 = vmul.f32 %v2092, %v2093
    %vm2095 = vcmp.eq.f32.partialorder %v2092, inf
    %v2096 = vsel %vm2095, %v2092, %v2094
    %vm2097 = vcmp.eq.f32.partialorder %v2092, 0.0
    %v2098 = vand.u32 %v2092, 2147483648
    %v2099 = vsel %vm2097, %v2098, %v2096
    %s2100 = vtos %v2099
    %2101 = vadd.xlane.f32.xlu0 %v1777
    %v2102 = vpop.xlane.xlu0 %2101
    %2103 = vadd.xlane.f32.xlu0 %v1782
    %v2104 = vpop.xlane.xlu0 %2103
    %2105 = vadd.xlane.f32.xlu0 %v1787
    %v2106 = vpop.xlane.xlu0 %2105
    %2107 = vadd.xlane.f32.xlu0 %v1792
    %v2108 = vpop.xlane.xlu0 %2107
    %2109 = vadd.xlane.f32.xlu0 %v1797
    %v2110 = vpop.xlane.xlu0 %2109
    %2111 = vadd.xlane.f32.xlu0 %v1802
    %v2112 = vpop.xlane.xlu0 %2111
    %2113 = vadd.xlane.f32.xlu0 %v1807
    %v2114 = vpop.xlane.xlu0 %2113
    %2115 = vadd.xlane.f32.xlu0 %v1812
    %v2116 = vpop.xlane.xlu0 %2115
    %2117 = vadd.xlane.f32.xlu0 %v1817
    %v2118 = vpop.xlane.xlu0 %2117
    %2119 = vadd.xlane.f32.xlu0 %v1822
    %v2120 = vpop.xlane.xlu0 %2119
    %2121 = vadd.xlane.f32.xlu0 %v1827
    %v2122 = vpop.xlane.xlu0 %2121
    %2123 = vadd.xlane.f32.xlu0 %v1832
    %v2124 = vpop.xlane.xlu0 %2123
    %2125 = vadd.xlane.f32.xlu0 %v1837
    %v2126 = vpop.xlane.xlu0 %2125
    %2127 = vadd.xlane.f32.xlu0 %v1842
    %v2128 = vpop.xlane.xlu0 %2127
    %2129 = vadd.xlane.f32.xlu0 %v1847
    %v2130 = vpop.xlane.xlu0 %2129
    %2131 = vadd.xlane.f32.xlu0 %v1852
    %v2132 = vpop.xlane.xlu0 %2131
    %v2133 = vmul.f32 %v2102, %v2102
    %v2134 = vmul.f32 %v2104, %v2104
    %v2135 = vmul.f32 %v2106, %v2106
    %v2136 = vmul.f32 %v2108, %v2108
    %v2137 = vmul.f32 %v2110, %v2110
    %v2138 = vmul.f32 %v2112, %v2112
    %v2139 = vmul.f32 %v2114, %v2114
    %v2140 = vmul.f32 %v2116, %v2116
    %v2141 = vmul.f32 %v2118, %v2118
    %v2142 = vmul.f32 %v2120, %v2120
    %v2143 = vmul.f32 %v2122, %v2122
    %v2144 = vmul.f32 %v2124, %v2124
    %v2145 = vmul.f32 %v2126, %v2126
    %v2146 = vmul.f32 %v2128, %v2128
    %v2147 = vmul.f32 %v2130, %v2130
    %v2148 = vmul.f32 %v2132, %v2132
    %vm2149 = vcmask 7168
    %v2150 = vsel %vm2149, %v2133, 0.0
    %v2151 = vsel %vm2149, %v2134, 0.0
    %v2152 = vadd.f32 %v2150, %v2151
    %v2153 = vsel %vm2149, %v2135, 0.0
    %v2154 = vadd.f32 %v2152, %v2153
    %v2155 = vsel %vm2149, %v2136, 0.0
    %v2156 = vadd.f32 %v2154, %v2155
    %v2157 = vsel %vm2149, %v2137, 0.0
    %v2158 = vadd.f32 %v2156, %v2157
    %v2159 = vsel %vm2149, %v2138, 0.0
    %v2160 = vadd.f32 %v2158, %v2159
    %v2161 = vsel %vm2149, %v2139, 0.0
    %v2162 = vadd.f32 %v2160, %v2161
    %v2163 = vsel %vm2149, %v2140, 0.0
    %v2164 = vadd.f32 %v2162, %v2163
    %v2165 = vsel %vm2149, %v2141, 0.0
    %v2166 = vadd.f32 %v2164, %v2165
    %v2167 = vsel %vm2149, %v2142, 0.0
    %v2168 = vadd.f32 %v2166, %v2167
    %v2169 = vsel %vm2149, %v2143, 0.0
    %v2170 = vadd.f32 %v2168, %v2169
    %v2171 = vsel %vm2149, %v2144, 0.0
    %v2172 = vadd.f32 %v2170, %v2171
    %v2173 = vsel %vm2149, %v2145, 0.0
    %v2174 = vadd.f32 %v2172, %v2173
    %v2175 = vsel %vm2149, %v2146, 0.0
    %v2176 = vadd.f32 %v2174, %v2175
    %v2177 = vsel %vm2149, %v2147, 0.0
    %v2178 = vadd.f32 %v2176, %v2177
    %v2179 = vsel %vm2149, %v2148, 0.0
    %v2180 = vadd.f32 %v2178, %v2179
    %2181 = vadd.xlane.f32.xlu0 %v2180
    %v2182 = vpop.xlane.xlu0 %2181
    %v2183 = vrot.slane %v2182, 4
    %v2184 = vadd.f32 %v2182, %v2183
    %v2185 = vrot.slane %v2184, 2
    %v2186 = vadd.f32 %v2184, %v2185
    %v2187 = vrot.slane %v2186, 1
    %v2188 = vadd.f32 %v2186, %v2187
    %s2189 = vtos %v2188
    %v2190 = vstv %s2189
    %v2191 = vrsqrt.pop %v2190
    %v2192 = vmul.f32 %v2190, %v2191
    %vm2193 = vcmp.eq.f32.partialorder %v2190, inf
    %v2194 = vsel %vm2193, %v2190, %v2192
    %vm2195 = vcmp.eq.f32.partialorder %v2190, 0.0
    %v2196 = vand.u32 %v2190, 2147483648
    %v2197 = vsel %vm2195, %v2196, %v2194
    %s2198 = vtos %v2197
    %v2199 = vrcp.pop 256.0
    %s2200 = vtos %v2199
    %s2201 = smul.f32 %s2198, %s2200
    %s2202 = smul.f32 %s2201, 2.828427
    %s2203 = ssub.f32 %s2202, 1.0
    %vm2204 = vcmp.eq.s32.totalorder %v53, 0
    %v2205 = vstv %s2100
    %v2206 = vsel %vm2204, %v2205, 0.0
    %vm2207 = vcmp.eq.s32.totalorder %v53, 1
    %v2208 = vstv %s2203
    %v2209 = vsel %vm2207, %v2208, 0.0
    %v2210 = vadd.f32 %v2206, %v2209
    %2211 = vst [vmem:[#allocation14] sm:$0x1] %v2210
    // Predicated region
    $region22: #{tpu_custom_call.1} parent=1 // pred_check
      _
    $region23: #{tpu_custom_call.1} parent=1 // pred_check_branch
      %2213 = sbr.rel (0) target = $region25
    $region24: #{tpu_custom_call.1} parent=1 // pred_region
      %s2215 = ssub.s32 4096, 4096
      %2216 = vsyncadd [#allocation4], %s2215
      %s2217 = sshll.u32 [#allocation7], 4
      %s2218 = int_to_ptr.vmem [resolvable:$true] %s2217
      %2223 = dma.vmem_to_hbm [thread:$0]  %s2218, 4096, %s3, [#allocation4], 128, 128, 8
    $region25: #{tpu_custom_call.1} parent=1 // pred_fallthru
      _
    // Predicated region
    $region26: #{tpu_custom_call.1} parent=1 // pred_check
      _
    $region27: #{tpu_custom_call.1} parent=1 // pred_check_branch
      %2225 = sbr.rel (0) target = $region29
    $region28: #{tpu_custom_call.1} parent=1 // pred_region
      %s2227 = ssub.s32 2048, 2048
      %2228 = vsyncadd [#allocation9], %s2227
      %s2229 = sshll.u32 [#allocation8], 4
      %s2230 = int_to_ptr.vmem [resolvable:$true] %s2229
      %2235 = dma.vmem_to_hbm [thread:$0]  %s2230, 2048, %s4, [#allocation9], 64, 64, 4
    $region29: #{tpu_custom_call.1} parent=1 // pred_fallthru
      _
    // Predicated region
    $region30: #{tpu_custom_call.1} parent=1 // pred_check
      _
    $region31: #{tpu_custom_call.1} parent=1 // pred_check_branch
      %2237 = sbr.rel (0) target = $region33
    $region32: #{tpu_custom_call.1} parent=1 // pred_region
      %s2239 = ssub.s32 4096, 4096
      %2240 = vsyncadd [#allocation9], %s2239
      %s2241 = sshll.u32 [#allocation10], 4
      %s2242 = int_to_ptr.vmem [resolvable:$true] %s2241
      %2247 = dma.vmem_to_hbm [thread:$0]  %s2242, 4096, %s5, [#allocation9], 128, 128, 8
    $region33: #{tpu_custom_call.1} parent=1 // pred_fallthru
      _
    // Predicated region
    $region34: #{tpu_custom_call.1} parent=1 // pred_check
      _
    $region35: #{tpu_custom_call.1} parent=1 // pred_check_branch
      %2249 = sbr.rel (0) target = $region37
    $region36: #{tpu_custom_call.1} parent=1 // pred_region
      %s2251 = ssub.s32 2048, 2048
      %2252 = vsyncadd [#allocation12], %s2251
      %s2253 = sshll.u32 [#allocation11], 4
      %s2254 = int_to_ptr.vmem [resolvable:$true] %s2253
      %2259 = dma.vmem_to_hbm [thread:$0]  %s2254, 2048, %s6, [#allocation12], 64, 64, 4
    $region37: #{tpu_custom_call.1} parent=1 // pred_fallthru
      _
    // Predicated region
    $region38: #{tpu_custom_call.1} parent=1 // pred_check
      _
    $region39: #{tpu_custom_call.1} parent=1 // pred_check_branch
      %2261 = sbr.rel (0) target = $region41
    $region40: #{tpu_custom_call.1} parent=1 // pred_region
      %s2263 = ssub.s32 2048, 2048
      %2264 = vsyncadd [#allocation12], %s2263
      %s2265 = sshll.u32 [#allocation13], 4
      %s2266 = int_to_ptr.vmem [resolvable:$true] %s2265
      %2271 = dma.vmem_to_hbm [thread:$0]  %s2266, 2048, %s7, [#allocation12], 128, 128, 8
    $region41: #{tpu_custom_call.1} parent=1 // pred_fallthru
      _
    // Predicated region
    $region42: #{tpu_custom_call.1} parent=1 // pred_check
      _
    $region43: #{tpu_custom_call.1} parent=1 // pred_check_branch
      %2273 = sbr.rel (0) target = $region45
    $region44: #{tpu_custom_call.1} parent=1 // pred_region
      %s2275 = ssub.s32 16, 16
      %2276 = vsyncadd [#allocation15], %s2275
      %s2278 = sshll.u32 [#allocation14], 4
      %s2279 = int_to_ptr.vmem [resolvable:$true] %s2278
      %2281 = dma.vmem_to_hbm [thread:$0]  %s2279, 16, %s8, [#allocation15]
    $region45: #{tpu_custom_call.1} parent=1 // pred_fallthru
      _
    // Predicated region
    $region46: #{tpu_custom_call.1} parent=1 // pred_check
      _
    $region47: #{tpu_custom_call.1} parent=1 // pred_check_branch
      %2283 = sbr.rel (0) target = $region49
    $region48: #{tpu_custom_call.1} parent=1 // pred_region
      %2284 = dma.done [#allocation4], 4096
    $region49: #{tpu_custom_call.1} parent=1 // pred_fallthru
      _
    // Predicated region
    $region50: #{tpu_custom_call.1} parent=1 // pred_check
      _
    $region51: #{tpu_custom_call.1} parent=1 // pred_check_branch
      %2286 = sbr.rel (0) target = $region53
    $region52: #{tpu_custom_call.1} parent=1 // pred_region
      %2287 = dma.done [#allocation9], 2048
    $region53: #{tpu_custom_call.1} parent=1 // pred_fallthru
      _
    // Predicated region
    $region54: #{tpu_custom_call.1} parent=1 // pred_check
      _
    $region55: #{tpu_custom_call.1} parent=1 // pred_check_branch
      %2289 = sbr.rel (0) target = $region57
    $region56: #{tpu_custom_call.1} parent=1 // pred_region
      %2290 = dma.done [#allocation9], 4096
    $region57: #{tpu_custom_call.1} parent=1 // pred_fallthru
      _
    // Predicated region
    $region58: #{tpu_custom_call.1} parent=1 // pred_check
      _
    $region59: #{tpu_custom_call.1} parent=1 // pred_check_branch
      %2292 = sbr.rel (0) target = $region61
    $region60: #{tpu_custom_call.1} parent=1 // pred_region
      %2293 = dma.done [#allocation12], 2048
    $region61: #{tpu_custom_call.1} parent=1 // pred_fallthru
      _
    // Predicated region
    $region62: #{tpu_custom_call.1} parent=1 // pred_check
      _
    $region63: #{tpu_custom_call.1} parent=1 // pred_check_branch
      %2295 = sbr.rel (0) target = $region65
    $region64: #{tpu_custom_call.1} parent=1 // pred_region
      %2296 = dma.done [#allocation12], 2048
    $region65: #{tpu_custom_call.1} parent=1 // pred_fallthru
      _
    // Predicated region
    $region66: #{tpu_custom_call.1} parent=1 // pred_check
      _
    $region67: #{tpu_custom_call.1} parent=1 // pred_check_branch
      %2298 = sbr.rel (0) target = $region69
    $region68: #{tpu_custom_call.1} parent=1 // pred_region
      %2299 = dma.done [#allocation15], 16
    $region69: #{tpu_custom_call.1} parent=1 // pred_fallthru
      _
    %2300 = vsyncpa [#allocation3], 1
    %2301 = vsyncpa [#allocation6], 1
    %2302 = vsyncpa [#allocation4], 1
    %2303 = vsyncpa [#allocation9], 1
    %2304 = vsyncpa [#allocation12], 1
    %2305 = vsyncpa [#allocation15], 1

</llo_original>
